<compile_context>
chip_gen: v7x
topology: tpu7x:2x2x1
jax: 0.10.0
libtpu: 0.0.40
codegen_flags: <defaults>
</compile_context>

<pallas_src>
import functools

import jax
import jax.numpy as jnp
from jax import lax
from jax.experimental import pallas as pl
from jax.experimental.pallas import tpu as pltpu


N_MELS = 80    # fixed by Vocoder.__init__ (self.n_mels = 80)
HOP = 128      # waveform samples synthesized per mel frame (lane aligned)
CHUNK = 512    # in-kernel matmul M-chunk (frames): bounds live ranges


def _vocoder_kernel(mel_ref, w_ref, b_ref, out_ref, *, tt, chunk):
    # mel_ref: (N_MELS, tt) f32   (native layout: frames on the lane axis)
    # w_ref:   (N_MELS, HOP) bf16
    # b_ref:   (1, HOP) f32
    # out_ref: (tt, HOP) f32
    w = w_ref[...]
    b = b_ref[...]

    def project(mel_slab):
        # TN dot: contract the mel-channel axis (dim 0 of both operands)
        # -> (frames, HOP) with f32 accumulation on the MXU.
        y = lax.dot_general(
            mel_slab.astype(jnp.bfloat16),
            w,
            dimension_numbers=(((0,), (0,)), ((), ())),
            preferred_element_type=jnp.float32,
        )
        return jnp.tanh(y + b).astype(out_ref.dtype)

    n_full = tt // chunk
    rem = tt - n_full * chunk

    if n_full > 0:
        def body(c, carry):
            start = pl.multiple_of(c * chunk, chunk)
            out_ref[pl.ds(start, chunk), :] = project(mel_ref[:, pl.ds(start, chunk)])
            return carry

        lax.fori_loop(0, n_full, body, 0, unroll=True)

    if rem > 0:
        start = n_full * chunk   # static
        out_ref[pl.ds(start, rem), :] = project(mel_ref[:, pl.ds(start, rem)])


@functools.partial(jax.jit, static_argnames=("tt",))
def vocoder_forward(mel_bct, weight, bias, *, tt=4096):
    """mel_bct: [B, n_mels, T] float32 -> waveform [B, T * HOP] float32."""
    B, C, T = mel_bct.shape
    assert C == N_MELS, f"expected {N_MELS} mel channels, got {C}"

    # Time-tile size: full extent when T is small, otherwise a lane-aligned
    # multiple of 128.  A non-dividing final tile is handled by the cdiv grid
    # (masked edge loads / stores).
    if T <= tt:
        tt = T
    else:
        tt = max((tt // 128) * 128, 128)
    num_t = pl.cdiv(T, tt)

    w_bf16 = weight.astype(jnp.bfloat16)               # tiny; VMEM-resident
    bias2d = bias.reshape(1, HOP).astype(jnp.float32)

    kernel = functools.partial(_vocoder_kernel, tt=tt, chunk=CHUNK)

    cost = pl.CostEstimate(
        flops=2 * B * T * C * HOP,
        transcendentals=B * T * HOP,
        bytes_accessed=(B * C * T * 4) + (C * HOP * 2) + (HOP * 4) + (B * T * HOP * 4),
    )

    out = pl.pallas_call(
        kernel,
        out_shape=jax.ShapeDtypeStruct((B, T, HOP), jnp.float32),
        grid_spec=pltpu.PrefetchScalarGridSpec(
            num_scalar_prefetch=0,
            # Long (time) axis leads so the megacore split on v7x has work
            # even when B == 1; both axes are fully parallel.
            grid=(num_t, B),
            in_specs=[
                # native [B, n_mels, T]: full mel axis, tt frames per step
                pl.BlockSpec((None, C, tt), lambda j, b: (b, 0, j)),
                pl.BlockSpec((C, HOP), lambda j, b: (0, 0)),
                pl.BlockSpec((1, HOP), lambda j, b: (0, 0)),
            ],
            out_specs=pl.BlockSpec((None, tt, HOP), lambda j, b: (b, j, 0)),
        ),
        compiler_params=pltpu.CompilerParams(
            dimension_semantics=("parallel", "parallel"),
        ),
        cost_estimate=cost,
    )(mel_bct, w_bf16, bias2d)

    # (B, T, HOP) -> (B, T*HOP): contiguous reshape, no data movement.
    return out.reshape(B, T * HOP)


def _reference_forward(mel_bct, weight, bias):
    """Pure-JAX f32 reference (module semantics)."""
    B, C, T = mel_bct.shape
    mel = jnp.transpose(mel_bct, (0, 2, 1)).reshape(B * T, C)
    y = jnp.tanh(mel @ weight + bias[None, :])
    return y.reshape(B, T * HOP)


if __name__ == "__main__":
    key = jax.random.PRNGKey(0)
    k_mel, k_w, k_b = jax.random.split(key, 3)

    # Deterministic synthetic parameters (no checkpoint load).
    weight = 0.05 * jax.random.normal(k_w, (N_MELS, HOP), dtype=jnp.float32)
    bias = 0.01 * jax.random.normal(k_b, (HOP,), dtype=jnp.float32)

    # Case 1: B=2, T=1024  -> single time tile, in-kernel chunked matmul.
    # Case 2: B=1, T=4500  -> T > tile: 2 time tiles with a masked edge tile,
    #                         batch of 1 (exercises the time-leading grid).
    for (B, T) in ((2, 1024), (1, 4500)):
        mel = jax.random.normal(k_mel, (B, N_MELS, T), dtype=jnp.float32)
        wav = jax.block_until_ready(vocoder_forward(mel, weight, bias))
        ref = _reference_forward(mel, weight, bias)
        assert wav.shape == (B, T * HOP), wav.shape
        # bf16 matmul operands with f32 accumulation: loosen tolerance vs the
        # pure-f32 reference (K=80 keeps the error well under 1e-2).
        assert jnp.allclose(wav, ref, atol=2e-2, rtol=2e-2), f"mismatch (B={B}, T={T})"

    print("KERNEL_OK")
</pallas_src>

<mosaic_0001>
module attributes {stable_mosaic.version = 11 : i64} {
  func.func @_vocoder_kernel(%arg0: i32, %arg1: i32, %arg2: memref<1x80x1024xf32, #tpu.memory_space<vmem>>, %arg3: memref<80x128xbf16, #tpu.memory_space<vmem>>, %arg4: memref<1x128xf32, #tpu.memory_space<vmem>>, %arg5: memref<1x1024x128xf32, #tpu.memory_space<vmem>>) attributes {dimension_semantics = [#tpu.dimension_semantics<parallel>, #tpu.dimension_semantics<parallel>], iteration_bounds = array<i64: 1, 2>, scalar_prefetch = 0 : i64, scratch_operands = 0 : i64, tpu.core_type = #tpu.core_type<tc>, window_params = [{transform_indices = @transform_0, window_bounds = array<i64: 1, 80, 1024>}, {pipeline_mode = #tpu.pipeline_mode<synchronous>, transform_indices = @transform_1, window_bounds = array<i64: 80, 128>}, {pipeline_mode = #tpu.pipeline_mode<synchronous>, transform_indices = @transform_2, window_bounds = array<i64: 1, 128>}, {transform_indices = @transform_3, window_bounds = array<i64: 1, 1024, 128>}]} {
    %c0 = arith.constant 0 : index
    %c0_0 = arith.constant 0 : index
    %0 = vector.load %arg3[%c0, %c0_0] : memref<80x128xbf16, #tpu.memory_space<vmem>>, vector<80x128xbf16>
    %c0_1 = arith.constant 0 : index
    %c0_2 = arith.constant 0 : index
    %1 = vector.load %arg4[%c0_1, %c0_2] : memref<1x128xf32, #tpu.memory_space<vmem>>, vector<1x128xf32>
    %c0_i32 = arith.constant 0 : i32
    %c512_i32 = arith.constant 512 : i32
    %2 = arith.muli %c0_i32, %c512_i32 : i32
    %3 = tpu.assume_multiple %2, 512 : i32
    %c0_3 = arith.constant 0 : index
    %c0_4 = arith.constant 0 : index
    %4 = arith.index_cast %3 : i32 to index
    %5 = vector.load %arg2[%c0_3, %c0_4, %4] : memref<1x80x1024xf32, #tpu.memory_space<vmem>>, vector<1x80x512xf32>
    %6 = vector.shape_cast %5 : vector<1x80x512xf32> to vector<80x512xf32>
    %7 = arith.truncf %6 : vector<80x512xf32> to vector<80x512xbf16>
    %cst = arith.constant dense<0.000000e+00> : vector<512x128xf32>
    %8 = tpu.matmul %7, %0, %cst {dimension_numbers = #tpu.dot_dimension_numbers<[0], [0], [1], [1], [0, 1, 1, 1], [], []>} : vector<80x512xbf16>, vector<80x128xbf16>, vector<512x128xf32> -> vector<512x128xf32>
    %9 = vector.broadcast %1 : vector<1x128xf32> to vector<512x128xf32>
    %10 = arith.addf %8, %9 : vector<512x128xf32>
    %11 = math.tanh %10 : vector<512x128xf32>
    %c0_5 = arith.constant 0 : index
    %12 = arith.index_cast %3 : i32 to index
    %c0_6 = arith.constant 0 : index
    %13 = vector.load %arg5[%c0_5, %12, %c0_6] : memref<1x1024x128xf32, #tpu.memory_space<vmem>>, vector<1x512x128xf32>
    %14 = vector.shape_cast %13 : vector<1x512x128xf32> to vector<512x128xf32>
    %15 = vector.shape_cast %11 : vector<512x128xf32> to vector<1x512x128xf32>
    tpu.vector_store %arg5[%c0_5, %12, %c0_6], %15 {strides = array<i32>} : memref<1x1024x128xf32, #tpu.memory_space<vmem>>, vector<1x512x128xf32>,
    %c1_i32 = arith.constant 1 : i32
    %c512_i32_7 = arith.constant 512 : i32
    %16 = arith.muli %c1_i32, %c512_i32_7 : i32
    %17 = tpu.assume_multiple %16, 512 : i32
    %c0_8 = arith.constant 0 : index
    %c0_9 = arith.constant 0 : index
    %18 = arith.index_cast %17 : i32 to index
    %19 = vector.load %arg2[%c0_8, %c0_9, %18] : memref<1x80x1024xf32, #tpu.memory_space<vmem>>, vector<1x80x512xf32>
    %20 = vector.shape_cast %19 : vector<1x80x512xf32> to vector<80x512xf32>
    %21 = arith.truncf %20 : vector<80x512xf32> to vector<80x512xbf16>
    %cst_10 = arith.constant dense<0.000000e+00> : vector<512x128xf32>
    %22 = tpu.matmul %21, %0, %cst_10 {dimension_numbers = #tpu.dot_dimension_numbers<[0], [0], [1], [1], [0, 1, 1, 1], [], []>} : vector<80x512xbf16>, vector<80x128xbf16>, vector<512x128xf32> -> vector<512x128xf32>
    %23 = vector.broadcast %1 : vector<1x128xf32> to vector<512x128xf32>
    %24 = arith.addf %22, %23 : vector<512x128xf32>
    %25 = math.tanh %24 : vector<512x128xf32>
    %c0_11 = arith.constant 0 : index
    %26 = arith.index_cast %17 : i32 to index
    %c0_12 = arith.constant 0 : index
    %27 = vector.load %arg5[%c0_11, %26, %c0_12] : memref<1x1024x128xf32, #tpu.memory_space<vmem>>, vector<1x512x128xf32>
    %28 = vector.shape_cast %27 : vector<1x512x128xf32> to vector<512x128xf32>
    %29 = vector.shape_cast %25 : vector<512x128xf32> to vector<1x512x128xf32>
    tpu.vector_store %arg5[%c0_11, %26, %c0_12], %29 {strides = array<i32>} : memref<1x1024x128xf32, #tpu.memory_space<vmem>>, vector<1x512x128xf32>,
    %c2_i32 = arith.constant 2 : i32
    return
  }
  func.func @transform_0(%arg0: i32, %arg1: i32) -> (i32, i32, i32) {
    %c0_i32 = arith.constant 0 : i32
    %c0_i32_0 = arith.constant 0 : i32
    return %arg1, %c0_i32, %arg0 : i32, i32, i32
  }
  func.func @transform_1(%arg0: i32, %arg1: i32) -> (i32, i32) {
    %c0_i32 = arith.constant 0 : i32
    %c0_i32_0 = arith.constant 0 : i32
    %c0_i32_1 = arith.constant 0 : i32
    return %c0_i32, %c0_i32_0 : i32, i32
  }
  func.func @transform_2(%arg0: i32, %arg1: i32) -> (i32, i32) {
    %c0_i32 = arith.constant 0 : i32
    %c0_i32_0 = arith.constant 0 : i32
    %c0_i32_1 = arith.constant 0 : i32
    return %c0_i32, %c0_i32_0 : i32, i32
  }
  func.func @transform_3(%arg0: i32, %arg1: i32) -> (i32, i32, i32) {
    %c0_i32 = arith.constant 0 : i32
    %c0_i32_0 = arith.constant 0 : i32
    return %arg1, %arg0, %c0_i32 : i32, i32, i32
  }
}

</mosaic_0001>

<llo_original>
// kernel: vocoder_forward.1
$region0: #{vocoder_forward.1}
  #allocation0 [shape = 'u32[]', space=smem, size = 0x4, offset = 0x4, fixed_abs, tag = 'smem constant byte address 0x4 - core index']
  #allocation1 [shape = 'u32[144,128]{1,0:T(1,128)}', space=vmem, size = 0x12000, scoped, tag = 'internal scratch']
  %s0 = inlined_call_operand.hbm [shape: f32[2,80,1024], index: 0, kind: input, shape index: {}]
  %s1 = inlined_call_operand.vmem [shape: bf16[80,128], index: 1, kind: input, shape index: {}]
  %s2 = inlined_call_operand.vmem [shape: f32[1,128], index: 2, kind: input, shape index: {}]
  %s3 = inlined_call_operand.vmem [shape: f32[2,1024,128], index: 3, kind: output, shape index: {}]
  %s4 = sld [smem:[#allocation0]]
  $region49: #{vocoder_forward.1} parent=0
    _
  %s6 = ssub.s32 1, %s4
  %s7 = scalar_select 0, %s6, %s4
  $region1: #{vocoder_forward.1} parent=0
    #allocation2 [shape = 'u8[655360]{0}', space=vmem, size = 0xa0000, scoped, tag = 'input window, operand 0']
    #allocation3 [shape = 's32[2]{0}', space=sflag, size = 0x8, scoped, tag = 'scoped memory for vocoder_forward.1']
    %8 = vsyncpa [#allocation3], 0
    %s9 = scalar_lea.sflag [#allocation3], 1
    %10 = vsyncpa %s9, 0
    loop: start=0, step=1, limit=4
    $region2: #{vocoder_forward.1} parent=1 // loop_pre_header
      _
    $region3: #{vocoder_forward.1} parent=1 // loop_header
      %s12 = sphi 0, %s16
      %p13 = scmp.ge.s32.totalorder %s12, 4
      %s19 = sphi 0, %s31
      %s20 = sphi 0, %s27
      %s21 = sphi 0, %s19
      %s22 = sphi 0, %s20
      %s23 = sphi 0, %s21
      %s24 = sphi 0, %s22
      %s36 = sphi 0, %s38
      %s39 = sphi 0, %s36
      %s40 = sphi 0, %s39
      %s56 = sphi 0, %s40
      %s60 = sphi 0, %s60
      %s62 = sphi 0, %s60
      %s63 = sphi 0, %s62
      %s77 = sphi 0, %s63
      %s81 = sphi 0, %s81
      %s83 = sphi 0, %s81
      %s84 = sphi 0, %s83
      %s98 = sphi 0, %s84
      %s106 = sphi 0, %s108
      %s109 = sphi 0, %s106
      %s110 = sphi 0, %s109
      %s126 = sphi 0, %s110
    $region4: #{vocoder_forward.1} parent=1 // loop_header_branch
      %15 = sbr.rel (%p13) target = $region8
    $region5: #{vocoder_forward.1} parent=1 // loop_body
      %s17 = ssub.s32 %s12, 1
      %s18 = ssub.s32 %s12, 2
      %s25 = sadd.s32 1, %s20
      %p26 = scmp.ge.s32.totalorder %s25, 2
      %s27 = scalar_select %p26, 0, %s25
      %s28 = sadd.s32 1, %s19
      %s29 = scalar_select %p26, %s28, %s19
      %p30 = scmp.ge.s32.totalorder %s29, 1
      %s31 = scalar_select %p30, 0, %s29
      %s32 = ssub.s32 %s20, %s27
      %s33 = ssub.s32 %s19, %s31
      %s34 = sor.u32 %s32, %s33
      %p35 = scmp.eq.s32.totalorder %s34, 0
      %s37 = sadd.s32 %s36, 1
      %s38 = scalar_select %p35, %s36, %s37
      %p41 = pneg %p35
      %p42 = scmp.eq.s32.totalorder %s12, 1
      %p43 = por %p41, %p42
      %p44 = scmp.ne.s32.totalorder %s36, %s39
      %p45 = scmp.eq.s32.totalorder %s12, 0
      %p46 = por %p44, %p45
      %p47 = scmp.ne.s32.totalorder %s36, %s39
      %p48 = scmp.eq.s32.totalorder %s17, 1
      %p49 = por %p47, %p48
      %p50 = scmp.ne.s32.totalorder %s39, %s40
      %p51 = scmp.eq.s32.totalorder %s17, 0
      %p52 = por %p50, %p51
      %p53 = scmp.ne.s32.totalorder %s39, %s40
      %p54 = scmp.eq.s32.totalorder %s18, 1
      %p55 = por %p53, %p54
      %p57 = scmp.ne.s32.totalorder %s40, %s56
      %p58 = scmp.eq.s32.totalorder %s18, 0
      %p59 = por %p57, %p58
      %s61 = sadd.s32 %s60, 1
      %p64 = scmp.eq.s32.totalorder %s12, 1
      %p65 = scmp.ne.s32.totalorder %s60, %s62
      %p66 = scmp.eq.s32.totalorder %s12, 0
      %p67 = por %p65, %p66
      %p68 = scmp.ne.s32.totalorder %s60, %s62
      %p69 = scmp.eq.s32.totalorder %s17, 1
      %p70 = por %p68, %p69
      %p71 = scmp.ne.s32.totalorder %s62, %s63
      %p72 = scmp.eq.s32.totalorder %s17, 0
      %p73 = por %p71, %p72
      %p74 = scmp.ne.s32.totalorder %s62, %s63
      %p75 = scmp.eq.s32.totalorder %s18, 1
      %p76 = por %p74, %p75
      %p78 = scmp.ne.s32.totalorder %s63, %s77
      %p79 = scmp.eq.s32.totalorder %s18, 0
      %p80 = por %p78, %p79
      %s82 = sadd.s32 %s81, 1
      %p85 = scmp.eq.s32.totalorder %s12, 1
      %p86 = scmp.ne.s32.totalorder %s81, %s83
      %p87 = scmp.eq.s32.totalorder %s12, 0
      %p88 = por %p86, %p87
      %p89 = scmp.ne.s32.totalorder %s81, %s83
      %p90 = scmp.eq.s32.totalorder %s17, 1
      %p91 = por %p89, %p90
      %p92 = scmp.ne.s32.totalorder %s83, %s84
      %p93 = scmp.eq.s32.totalorder %s17, 0
      %p94 = por %p92, %p93
      %p95 = scmp.ne.s32.totalorder %s83, %s84
      %p96 = scmp.eq.s32.totalorder %s18, 1
      %p97 = por %p95, %p96
      %p99 = scmp.ne.s32.totalorder %s84, %s98
      %p100 = scmp.eq.s32.totalorder %s18, 0
      %p101 = por %p99, %p100
      %s102 = ssub.s32 %s20, %s27
      %s103 = ssub.s32 %s19, %s31
      %s104 = sor.u32 %s102, %s103
      %p105 = scmp.eq.s32.totalorder %s104, 0
      %s107 = sadd.s32 %s106, 1
      %s108 = scalar_select %p105, %s106, %s107
      %p111 = pneg %p105
      %p112 = scmp.eq.s32.totalorder %s12, 1
      %p113 = por %p111, %p112
      %p114 = scmp.ne.s32.totalorder %s106, %s109
      %p115 = scmp.eq.s32.totalorder %s12, 0
      %p116 = por %p114, %p115
      %p117 = scmp.ne.s32.totalorder %s106, %s109
      %p118 = scmp.eq.s32.totalorder %s17, 1
      %p119 = por %p117, %p118
      %p120 = scmp.ne.s32.totalorder %s109, %s110
      %p121 = scmp.eq.s32.totalorder %s17, 0
      %p122 = por %p120, %p121
      %p123 = scmp.ne.s32.totalorder %s109, %s110
      %p124 = scmp.eq.s32.totalorder %s18, 1
      %p125 = por %p123, %p124
      %p127 = scmp.ne.s32.totalorder %s110, %s126
      %p128 = scmp.eq.s32.totalorder %s18, 0
      %p129 = por %p127, %p128
      %p130 = scmp.le.s32.totalorder 1, %s12
      %p131 = scmp.lt.s32.totalorder %s12, 3
      %p132 = pnand %p130, %p131
      %p133 = pneg %p132
      // Predicated region
      $region9: #{vocoder_forward.1} parent=5 // pred_check
        _
      $region10: #{vocoder_forward.1} parent=5 // pred_check_branch
        %135 = sbr.rel (%p132) target = $region12
      $region11: #{vocoder_forward.1} parent=5 // pred_region
        %s136 = ssub.s32 %s12, 1
        // Predicated region
        $region13: #{vocoder_forward.1} parent=11 // pred_check
          %p137 = pneg %p73
        $region14: #{vocoder_forward.1} parent=11 // pred_check_branch
          %139 = sbr.rel (%p137) target = $region16
        $region15: #{vocoder_forward.1} parent=11 // pred_region
          _
        $region16: #{vocoder_forward.1} parent=11 // pred_fallthru
          _
        // Predicated region
        $region17: #{vocoder_forward.1} parent=11 // pred_check
          %p140 = pneg %p94
        $region18: #{vocoder_forward.1} parent=11 // pred_check_branch
          %142 = sbr.rel (%p140) target = $region20
        $region19: #{vocoder_forward.1} parent=11 // pred_region
          _
        $region20: #{vocoder_forward.1} parent=11 // pred_fallthru
          _
      $region12: #{vocoder_forward.1} parent=5 // pred_fallthru
        _
      %p143 = scmp.lt.s32.totalorder %s12, 2
      // Predicated region
      $region21: #{vocoder_forward.1} parent=5 // pred_check
        %p144 = pneg %p143
      $region22: #{vocoder_forward.1} parent=5 // pred_check_branch
        %146 = sbr.rel (%p144) target = $region24
      $region23: #{vocoder_forward.1} parent=5 // pred_region
        // Predicated region
        $region25: #{vocoder_forward.1} parent=23 // pred_check
          %p147 = pneg %p46
        $region26: #{vocoder_forward.1} parent=23 // pred_check_branch
          %149 = sbr.rel (%p147) target = $region28
        $region27: #{vocoder_forward.1} parent=23 // pred_region
          %s150 = sand.u32 %s36, 1
          %s151 = scalar_lea.sflag [#allocation3], %s150
          %s152 = sand.u32 %s36, 1
          %s153 = smul.addr %s152, 640
          %s154 = scalar_lea.vmem [#allocation2], %s153
          %s155 = smul.u32 8, %s19
          %s157 = ssub.s32 10240, 10240
          %158 = vsyncadd %s151, %s157
          %s159 = smul.addr %s20, 80
          %s160 = sadd.s32 %s155, %s159
          %s161 = smul.addr %s160, 128
          %s162 = scalar_lea.hbm %s0, %s161
          %s163 = sshll.u32 %s154, 4
          %s164 = int_to_ptr.vmem [resolvable:$true] %s163
          %169 = dma.hbm_to_vmem [thread:$0]  %s162, 10240, %s164, %s151, 1024, 1024, 64
        $region28: #{vocoder_forward.1} parent=23 // pred_fallthru
          _
      $region24: #{vocoder_forward.1} parent=5 // pred_fallthru
        _
      %p170 = scmp.le.s32.totalorder 1, %s12
      %p171 = scmp.lt.s32.totalorder %s12, 3
      %p172 = pnand %p170, %p171
      %p173 = pneg %p172
      // Predicated region
      $region29: #{vocoder_forward.1} parent=5 // pred_check
        _
      $region30: #{vocoder_forward.1} parent=5 // pred_check_branch
        %175 = sbr.rel (%p172) target = $region32
      $region31: #{vocoder_forward.1} parent=5 // pred_region
        %s176 = ssub.s32 %s12, 1
        %s177 = sand.u32 %s39, 1
        %s178 = scalar_lea.sflag [#allocation3], %s177
        %s179 = sand.u32 %s39, 1
        %s180 = smul.addr %s179, 640
        %s181 = scalar_lea.vmem [#allocation2], %s180
        // Predicated region
        $region33: #{vocoder_forward.1} parent=31 // pred_check
          %p182 = pneg %p52
        $region34: #{vocoder_forward.1} parent=31 // pred_check_branch
          %184 = sbr.rel (%p182) target = $region36
        $region35: #{vocoder_forward.1} parent=31 // pred_region
          %185 = dma.done %s178, 10240
        $region36: #{vocoder_forward.1} parent=31 // pred_fallthru
          _
        %s186 = sand.u32 %s39, 1
        %s187 = scalar_lea.sflag [#allocation3], %s186
        %s188 = sand.u32 %s39, 1
        %s189 = smul.addr %s188, 640
        %s190 = scalar_lea.vmem [#allocation2], %s189
        %p191 = pneg %p52
        %p192 = pneg %p49
        %p193 = pneg %p73
        %p194 = pneg %p70
        %p195 = pneg %p94
        %p196 = pneg %p91
        %p197 = pneg %p122
        %p198 = pneg %p119
        %s199 = smul.u32 128, %s21
        %p200 = scmp.lt.s32.totalorder %s22, 1
        %s201 = scalar_select %p200, %s22, 1
        %p202 = scmp.lt.s32.totalorder %s199, 127
        %s203 = scalar_select %p202, %s199, 127
        %s204 = smul.addr %s201, 128
        %s205 = sadd.s32 %s203, %s204
        %s206 = smul.addr %s205, 8
        %s207 = scalar_lea.vmem %s3, %s206
        %s208 = smul.u32 8, %s21
        %s209 = smul.u32 128, %s21
        %p210 = scmp.lt.s32.totalorder %s22, 1
        %s211 = scalar_select %p210, %s22, 1
        %p212 = scmp.lt.s32.totalorder %s209, 127
        %s213 = scalar_select %p212, %s209, 127
        %s214 = smul.addr %s211, 128
        %s215 = sadd.s32 %s213, %s214
        %s216 = smul.addr %s215, 8
        %s217 = scalar_lea.vmem %s3, %s216
        %s218 = smul.u32 128, %s21
        %v220 = vld [vmem:[%s1] sm:$0xf]
        %v221 = vld [vmem:[%s1 + $0x4] sm:$0xf]
        %v222 = vld [vmem:[%s1 + $0x8] sm:$0xf]
        %v223 = vld [vmem:[%s1 + $0xc] sm:$0xf]
        %v224 = vld [vmem:[%s1 + $0x10] sm:$0xf]
        %v225 = vld [vmem:[%s1 + $0x14] sm:$0xf]
        %v226 = vld [vmem:[%s1 + $0x18] sm:$0xf]
        %v227 = vld [vmem:[%s1 + $0x1c] sm:$0xf]
        %v228 = vld [vmem:[%s1 + $0x20] sm:$0xf]
        %v229 = vld [vmem:[%s1 + $0x24] sm:$0xf]
        %v230 = vld [vmem:[%s2] sm:$0x1]
        %v231 = vld [vmem:[%s181] sm:$0xff]
        %v232 = vld [vmem:[%s181 + $0x8] sm:$0xff]
        %v233 = vld [vmem:[%s181 + $0x10] sm:$0xff]
        %v234 = vld [vmem:[%s181 + $0x18] sm:$0xff]
        %v235 = vld [vmem:[%s181 + $0x40] sm:$0xff]
        %v236 = vld [vmem:[%s181 + $0x48] sm:$0xff]
        %v237 = vld [vmem:[%s181 + $0x50] sm:$0xff]
        %v238 = vld [vmem:[%s181 + $0x58] sm:$0xff]
        %v239 = vld [vmem:[%s181 + $0x80] sm:$0xff]
        %v240 = vld [vmem:[%s181 + $0x88] sm:$0xff]
        %v241 = vld [vmem:[%s181 + $0x90] sm:$0xff]
        %v242 = vld [vmem:[%s181 + $0x98] sm:$0xff]
        %v243 = vld [vmem:[%s181 + $0xc0] sm:$0xff]
        %v244 = vld [vmem:[%s181 + $0xc8] sm:$0xff]
        %v245 = vld [vmem:[%s181 + $0xd0] sm:$0xff]
        %v246 = vld [vmem:[%s181 + $0xd8] sm:$0xff]
        %v247 = vld [vmem:[%s181 + $0x100] sm:$0xff]
        %v248 = vld [vmem:[%s181 + $0x108] sm:$0xff]
        %v249 = vld [vmem:[%s181 + $0x110] sm:$0xff]
        %v250 = vld [vmem:[%s181 + $0x118] sm:$0xff]
        %v251 = vld [vmem:[%s181 + $0x140] sm:$0xff]
        %v252 = vld [vmem:[%s181 + $0x148] sm:$0xff]
        %v253 = vld [vmem:[%s181 + $0x150] sm:$0xff]
        %v254 = vld [vmem:[%s181 + $0x158] sm:$0xff]
        %v255 = vld [vmem:[%s181 + $0x180] sm:$0xff]
        %v256 = vld [vmem:[%s181 + $0x188] sm:$0xff]
        %v257 = vld [vmem:[%s181 + $0x190] sm:$0xff]
        %v258 = vld [vmem:[%s181 + $0x198] sm:$0xff]
        %v259 = vld [vmem:[%s181 + $0x1c0] sm:$0xff]
        %v260 = vld [vmem:[%s181 + $0x1c8] sm:$0xff]
        %v261 = vld [vmem:[%s181 + $0x1d0] sm:$0xff]
        %v262 = vld [vmem:[%s181 + $0x1d8] sm:$0xff]
        %v263 = vld [vmem:[%s181 + $0x200] sm:$0xff]
        %v264 = vld [vmem:[%s181 + $0x208] sm:$0xff]
        %v265 = vld [vmem:[%s181 + $0x210] sm:$0xff]
        %v266 = vld [vmem:[%s181 + $0x218] sm:$0xff]
        %v267 = vld [vmem:[%s181 + $0x240] sm:$0xff]
        %v268 = vld [vmem:[%s181 + $0x248] sm:$0xff]
        %v269 = vld [vmem:[%s181 + $0x250] sm:$0xff]
        %v270 = vld [vmem:[%s181 + $0x258] sm:$0xff]
        %v271 = vpack.c.bf16 %v235, %v231
        %v272 = vpack.c.bf16 %v236, %v232
        %v273 = vpack.c.bf16 %v237, %v233
        %v274 = vpack.c.bf16 %v238, %v234
        %v275 = vpack.c.bf16 %v243, %v239
        %v276 = vpack.c.bf16 %v244, %v240
        %v277 = vpack.c.bf16 %v245, %v241
        %v278 = vpack.c.bf16 %v246, %v242
        %v279 = vpack.c.bf16 %v251, %v247
        %v280 = vpack.c.bf16 %v252, %v248
        %v281 = vpack.c.bf16 %v253, %v249
        %v282 = vpack.c.bf16 %v254, %v250
        %v283 = vpack.c.bf16 %v259, %v255
        %v284 = vpack.c.bf16 %v260, %v256
        %v285 = vpack.c.bf16 %v261, %v257
        %v286 = vpack.c.bf16 %v262, %v258
        %v287 = vpack.c.bf16 %v267, %v263
        %v288 = vpack.c.bf16 %v268, %v264
        %v289 = vpack.c.bf16 %v269, %v265
        %v290 = vpack.c.bf16 %v270, %v266
        %v292 = vlaneseq
        %v293 = vshrl.u32 %v292, 7
        %v294 = vsub.s32 0, %v293
        %v295 = vrot.slane %v230, %v294
        %297 = vxpose.xlu0.c.b16.start [1/8] %v271, 128
        %298 = vxpose.xlu0.c.b16.cont [2/8] %v275, 128
        %299 = vxpose.xlu0.c.b16.cont [3/8] %v279, 128
        %300 = vxpose.xlu0.c.b16.cont [4/8] %v283, 128
        %301 = vxpose.xlu0.c.b16.cont [5/8] %v287, 128
        %302 = vxpose.xlu0.c.b16.cont [6/8] 0, 128
        %303 = vxpose.xlu0.c.b16.cont [7/8] 0, 128
        %304 = vxpose.xlu0.c.b16.end [8/8] 0, 128
        %v305 = vpop.trf.xlu0
        %v306 = vpop.trf.xlu0
        %v307 = vpop.trf.xlu0
        %v308 = vpop.trf.xlu0
        %v309 = vpop.trf.xlu0
        %v310 = vpop.trf.xlu0
        %v311 = vpop.trf.xlu0
        %v312 = vpop.trf.xlu0
        %313 = vxpose.xlu0.c.b16.start [1/8] %v272, 128
        %314 = vxpose.xlu0.c.b16.cont [2/8] %v276, 128
        %315 = vxpose.xlu0.c.b16.cont [3/8] %v280, 128
        %316 = vxpose.xlu0.c.b16.cont [4/8] %v284, 128
        %317 = vxpose.xlu0.c.b16.cont [5/8] %v288, 128
        %318 = vxpose.xlu0.c.b16.cont [6/8] 0, 128
        %319 = vxpose.xlu0.c.b16.cont [7/8] 0, 128
        %320 = vxpose.xlu0.c.b16.end [8/8] 0, 128
        %v321 = vpop.trf.xlu0
        %v322 = vpop.trf.xlu0
        %v323 = vpop.trf.xlu0
        %v324 = vpop.trf.xlu0
        %v325 = vpop.trf.xlu0
        %v326 = vpop.trf.xlu0
        %v327 = vpop.trf.xlu0
        %v328 = vpop.trf.xlu0
        %329 = vxpose.xlu0.c.b16.start [1/8] %v273, 128
        %330 = vxpose.xlu0.c.b16.cont [2/8] %v277, 128
        %331 = vxpose.xlu0.c.b16.cont [3/8] %v281, 128
        %332 = vxpose.xlu0.c.b16.cont [4/8] %v285, 128
        %333 = vxpose.xlu0.c.b16.cont [5/8] %v289, 128
        %334 = vxpose.xlu0.c.b16.cont [6/8] 0, 128
        %335 = vxpose.xlu0.c.b16.cont [7/8] 0, 128
        %336 = vxpose.xlu0.c.b16.end [8/8] 0, 128
        %v337 = vpop.trf.xlu0
        %v338 = vpop.trf.xlu0
        %v339 = vpop.trf.xlu0
        %v340 = vpop.trf.xlu0
        %v341 = vpop.trf.xlu0
        %v342 = vpop.trf.xlu0
        %v343 = vpop.trf.xlu0
        %v344 = vpop.trf.xlu0
        %345 = vxpose.xlu0.c.b16.start [1/8] %v274, 128
        %346 = vxpose.xlu0.c.b16.cont [2/8] %v278, 128
        %347 = vxpose.xlu0.c.b16.cont [3/8] %v282, 128
        %348 = vxpose.xlu0.c.b16.cont [4/8] %v286, 128
        %349 = vxpose.xlu0.c.b16.cont [5/8] %v290, 128
        %350 = vxpose.xlu0.c.b16.cont [6/8] 0, 128
        %351 = vxpose.xlu0.c.b16.cont [7/8] 0, 128
        %352 = vxpose.xlu0.c.b16.end [8/8] 0, 128
        %v353 = vpop.trf.xlu0
        %v354 = vpop.trf.xlu0
        %v355 = vpop.trf.xlu0
        %v356 = vpop.trf.xlu0
        %v357 = vpop.trf.xlu0
        %v358 = vpop.trf.xlu0
        %v359 = vpop.trf.xlu0
        %v360 = vpop.trf.xlu0
        %v371 = vunpack.c.l.b16 %v220
        %v372 = vunpack.c.l.b16 %v221
        %v373 = vunpack.c.l.b16 %v222
        %v374 = vunpack.c.l.b16 %v223
        %v375 = vunpack.c.l.b16 %v224
        %v376 = vunpack.c.l.b16 %v225
        %v377 = vunpack.c.l.b16 %v226
        %v378 = vunpack.c.l.b16 %v227
        %v379 = vunpack.c.l.b16 %v228
        %v380 = vunpack.c.l.b16 %v229
        %v381 = vpack.c.b16 %v372, %v371
        %v382 = vpack.c.b16 %v374, %v373
        %v383 = vpack.c.b16 %v376, %v375
        %v384 = vpack.c.b16 %v378, %v377
        %v385 = vpack.c.b16 %v380, %v379
        %vm391 = vcmask 654336
        %v393 = vsel %vm391, %v305, 0
        %v396 = vsel %vm391, %v306, 0
        %v399 = vsel %vm391, %v307, 0
        %v402 = vsel %vm391, %v308, 0
        %v405 = vsel %vm391, %v309, 0
        %v408 = vsel %vm391, %v310, 0
        %v411 = vsel %vm391, %v311, 0
        %v414 = vsel %vm391, %v312, 0
        %v417 = vsel %vm391, %v321, 0
        %v420 = vsel %vm391, %v322, 0
        %v423 = vsel %vm391, %v323, 0
        %v426 = vsel %vm391, %v324, 0
        %v429 = vsel %vm391, %v325, 0
        %v432 = vsel %vm391, %v326, 0
        %v435 = vsel %vm391, %v327, 0
        %v438 = vsel %vm391, %v328, 0
        %v441 = vsel %vm391, %v337, 0
        %v444 = vsel %vm391, %v338, 0
        %v447 = vsel %vm391, %v339, 0
        %v450 = vsel %vm391, %v340, 0
        %v453 = vsel %vm391, %v341, 0
        %v456 = vsel %vm391, %v342, 0
        %v459 = vsel %vm391, %v343, 0
        %v462 = vsel %vm391, %v344, 0
        %v465 = vsel %vm391, %v353, 0
        %v468 = vsel %vm391, %v354, 0
        %v471 = vsel %vm391, %v355, 0
        %v474 = vsel %vm391, %v356, 0
        %v477 = vsel %vm391, %v357, 0
        %v480 = vsel %vm391, %v358, 0
        %v483 = vsel %vm391, %v359, 0
        %v486 = vsel %vm391, %v360, 0
        %488 = vmatprep.subr.bf16.mxu0 0
        %489 = vmatpush1.bf16.msra.mxu0 %v381
        %490 = vmatprep.subr.bf16.mxu0 0
        %491 = vmatpush1.bf16.msra.mxu0 %v382
        %492 = vmatprep.subr.bf16.mxu0 0
        %493 = vmatpush1.bf16.msra.mxu0 %v383
        %494 = vmatprep.subr.bf16.mxu0 0
        %495 = vmatpush1.bf16.msra.mxu0 %v384
        %496 = vmatprep.subr.bf16.mxu0 0
        %497 = vmatpush1.bf16.msra.mxu0 %v385
        %498 = vmatprep.subr.bf16.mxu0 0
        %499 = vmatpush1.bf16.msra.mxu0 0
        %500 = vmatprep.subr.bf16.mxu0 0
        %501 = vmatpush1.bf16.msra.mxu0 0
        %502 = vmatprep.subr.bf16.mxu0 0
        %503 = vmatpush1.bf16.msra.mxu0 0
        %504 = vmatprep.subr.bf16.mxu0 0
        %505 = vmatpush1.bf16.msra.mxu0 0
        %506 = vmatprep.subr.bf16.mxu0 0
        %507 = vmatpush1.bf16.msra.mxu0 0
        %508 = vmatprep.subr.bf16.mxu0 0
        %509 = vmatpush1.bf16.msra.mxu0 0
        %510 = vmatprep.subr.bf16.mxu0 0
        %511 = vmatpush1.bf16.msra.mxu0 0
        %512 = vmatprep.subr.bf16.mxu0 0
        %513 = vmatpush1.bf16.msra.mxu0 0
        %514 = vmatprep.subr.bf16.mxu0 0
        %515 = vmatpush1.bf16.msra.mxu0 0
        %516 = vmatprep.subr.bf16.mxu0 0
        %517 = vmatpush1.bf16.msra.mxu0 0
        %518 = vmatprep.subr.bf16.mxu0 0
        %519 = vmatpush1.bf16.msra.mxu0 0
        %520 = vmatprep.mubr.bf16.mxu0 0
        %521 = vmatmul.mubr.bf16.gmra.mrb[0].mxu0 %v393
        %v522 = vpop.f32.mrb[0].mxu0
        %v523 = vadd.f32 %v295, %v522
        %v524 = vpop.f32.mrb[0].mxu0
        %v525 = vpop.f32.mrb[0].mxu0
        %v526 = vadd.f32 %v295, %v525
        %v527 = vpop.f32.mrb[0].mxu0
        %528 = vmatprep.mubr.bf16.mxu0 0
        %529 = vmatmul.mubr.bf16.gmra.mrb[0].mxu0 %v396
        %v530 = vpop.f32.mrb[0].mxu0
        %v531 = vadd.f32 %v295, %v530
        %v532 = vpop.f32.mrb[0].mxu0
        %v533 = vpop.f32.mrb[0].mxu0
        %v534 = vadd.f32 %v295, %v533
        %v535 = vpop.f32.mrb[0].mxu0
        %536 = vmatprep.mubr.bf16.mxu0 0
        %537 = vmatmul.mubr.bf16.gmra.mrb[0].mxu0 %v399
        %v538 = vpop.f32.mrb[0].mxu0
        %v539 = vadd.f32 %v295, %v538
        %v540 = vpop.f32.mrb[0].mxu0
        %v541 = vpop.f32.mrb[0].mxu0
        %v542 = vadd.f32 %v295, %v541
        %v543 = vpop.f32.mrb[0].mxu0
        %544 = vmatprep.mubr.bf16.mxu0 0
        %545 = vmatmul.mubr.bf16.gmra.mrb[0].mxu0 %v402
        %v546 = vpop.f32.mrb[0].mxu0
        %v547 = vadd.f32 %v295, %v546
        %v548 = vpop.f32.mrb[0].mxu0
        %v549 = vpop.f32.mrb[0].mxu0
        %v550 = vadd.f32 %v295, %v549
        %v551 = vpop.f32.mrb[0].mxu0
        %552 = vmatprep.mubr.bf16.mxu0 0
        %553 = vmatmul.mubr.bf16.gmra.mrb[0].mxu0 %v405
        %v554 = vpop.f32.mrb[0].mxu0
        %v555 = vadd.f32 %v295, %v554
        %v556 = vpop.f32.mrb[0].mxu0
        %v557 = vpop.f32.mrb[0].mxu0
        %v558 = vadd.f32 %v295, %v557
        %v559 = vpop.f32.mrb[0].mxu0
        %560 = vmatprep.mubr.bf16.mxu0 0
        %561 = vmatmul.mubr.bf16.gmra.mrb[0].mxu0 %v408
        %v562 = vpop.f32.mrb[0].mxu0
        %v563 = vadd.f32 %v295, %v562
        %v564 = vpop.f32.mrb[0].mxu0
        %v565 = vpop.f32.mrb[0].mxu0
        %v566 = vadd.f32 %v295, %v565
        %v567 = vpop.f32.mrb[0].mxu0
        %568 = vmatprep.mubr.bf16.mxu0 0
        %569 = vmatmul.mubr.bf16.gmra.mrb[0].mxu0 %v411
        %v570 = vpop.f32.mrb[0].mxu0
        %v571 = vadd.f32 %v295, %v570
        %v572 = vpop.f32.mrb[0].mxu0
        %v573 = vpop.f32.mrb[0].mxu0
        %v574 = vadd.f32 %v295, %v573
        %v575 = vpop.f32.mrb[0].mxu0
        %576 = vmatprep.mubr.bf16.mxu0 0
        %577 = vmatmul.mubr.bf16.gmra.mrb[0].mxu0 %v414
        %v578 = vpop.f32.mrb[0].mxu0
        %v579 = vadd.f32 %v295, %v578
        %v580 = vpop.f32.mrb[0].mxu0
        %v581 = vpop.f32.mrb[0].mxu0
        %v582 = vadd.f32 %v295, %v581
        %v583 = vpop.f32.mrb[0].mxu0
        %584 = vmatprep.mubr.bf16.mxu0 0
        %585 = vmatmul.mubr.bf16.gmra.mrb[0].mxu0 %v417
        %v586 = vpop.f32.mrb[0].mxu0
        %v587 = vadd.f32 %v295, %v586
        %v588 = vpop.f32.mrb[0].mxu0
        %v589 = vpop.f32.mrb[0].mxu0
        %v590 = vadd.f32 %v295, %v589
        %v591 = vpop.f32.mrb[0].mxu0
        %592 = vmatprep.mubr.bf16.mxu0 0
        %593 = vmatmul.mubr.bf16.gmra.mrb[0].mxu0 %v420
        %v594 = vpop.f32.mrb[0].mxu0
        %v595 = vadd.f32 %v295, %v594
        %v596 = vpop.f32.mrb[0].mxu0
        %v597 = vpop.f32.mrb[0].mxu0
        %v598 = vadd.f32 %v295, %v597
        %v599 = vpop.f32.mrb[0].mxu0
        %600 = vmatprep.mubr.bf16.mxu0 0
        %601 = vmatmul.mubr.bf16.gmra.mrb[0].mxu0 %v423
        %v602 = vpop.f32.mrb[0].mxu0
        %v603 = vadd.f32 %v295, %v602
        %v604 = vpop.f32.mrb[0].mxu0
        %v605 = vpop.f32.mrb[0].mxu0
        %v606 = vadd.f32 %v295, %v605
        %v607 = vpop.f32.mrb[0].mxu0
        %608 = vmatprep.mubr.bf16.mxu0 0
        %609 = vmatmul.mubr.bf16.gmra.mrb[0].mxu0 %v426
        %v610 = vpop.f32.mrb[0].mxu0
        %v611 = vadd.f32 %v295, %v610
        %v612 = vpop.f32.mrb[0].mxu0
        %v613 = vpop.f32.mrb[0].mxu0
        %v614 = vadd.f32 %v295, %v613
        %v615 = vpop.f32.mrb[0].mxu0
        %616 = vmatprep.mubr.bf16.mxu0 0
        %617 = vmatmul.mubr.bf16.gmra.mrb[0].mxu0 %v429
        %v618 = vpop.f32.mrb[0].mxu0
        %v619 = vadd.f32 %v295, %v618
        %v620 = vpop.f32.mrb[0].mxu0
        %v621 = vpop.f32.mrb[0].mxu0
        %v622 = vadd.f32 %v295, %v621
        %v623 = vpop.f32.mrb[0].mxu0
        %624 = vmatprep.mubr.bf16.mxu0 0
        %625 = vmatmul.mubr.bf16.gmra.mrb[0].mxu0 %v432
        %v626 = vpop.f32.mrb[0].mxu0
        %v627 = vadd.f32 %v295, %v626
        %v628 = vpop.f32.mrb[0].mxu0
        %v629 = vpop.f32.mrb[0].mxu0
        %v630 = vadd.f32 %v295, %v629
        %v631 = vpop.f32.mrb[0].mxu0
        %632 = vmatprep.mubr.bf16.mxu0 0
        %633 = vmatmul.mubr.bf16.gmra.mrb[0].mxu0 %v435
        %v634 = vpop.f32.mrb[0].mxu0
        %v635 = vadd.f32 %v295, %v634
        %v636 = vpop.f32.mrb[0].mxu0
        %v637 = vpop.f32.mrb[0].mxu0
        %v638 = vadd.f32 %v295, %v637
        %v639 = vpop.f32.mrb[0].mxu0
        %640 = vmatprep.mubr.bf16.mxu0 0
        %641 = vmatmul.mubr.bf16.gmra.mrb[0].mxu0 %v438
        %v642 = vpop.f32.mrb[0].mxu0
        %v643 = vadd.f32 %v295, %v642
        %v644 = vpop.f32.mrb[0].mxu0
        %v645 = vpop.f32.mrb[0].mxu0
        %v646 = vadd.f32 %v295, %v645
        %v647 = vpop.f32.mrb[0].mxu0
        %648 = vmatprep.mubr.bf16.mxu0 0
        %649 = vmatmul.mubr.bf16.gmra.mrb[0].mxu0 %v441
        %v650 = vpop.f32.mrb[0].mxu0
        %v651 = vadd.f32 %v295, %v650
        %v652 = vpop.f32.mrb[0].mxu0
        %v653 = vpop.f32.mrb[0].mxu0
        %v654 = vadd.f32 %v295, %v653
        %v655 = vpop.f32.mrb[0].mxu0
        %656 = vmatprep.mubr.bf16.mxu0 0
        %657 = vmatmul.mubr.bf16.gmra.mrb[0].mxu0 %v444
        %v658 = vpop.f32.mrb[0].mxu0
        %v659 = vadd.f32 %v295, %v658
        %v660 = vpop.f32.mrb[0].mxu0
        %v661 = vpop.f32.mrb[0].mxu0
        %v662 = vadd.f32 %v295, %v661
        %v663 = vpop.f32.mrb[0].mxu0
        %664 = vmatprep.mubr.bf16.mxu0 0
        %665 = vmatmul.mubr.bf16.gmra.mrb[0].mxu0 %v447
        %v666 = vpop.f32.mrb[0].mxu0
        %v667 = vadd.f32 %v295, %v666
        %v668 = vpop.f32.mrb[0].mxu0
        %v669 = vpop.f32.mrb[0].mxu0
        %v670 = vadd.f32 %v295, %v669
        %v671 = vpop.f32.mrb[0].mxu0
        %672 = vmatprep.mubr.bf16.mxu0 0
        %673 = vmatmul.mubr.bf16.gmra.mrb[0].mxu0 %v450
        %v674 = vpop.f32.mrb[0].mxu0
        %v675 = vadd.f32 %v295, %v674
        %v676 = vpop.f32.mrb[0].mxu0
        %v677 = vpop.f32.mrb[0].mxu0
        %v678 = vadd.f32 %v295, %v677
        %v679 = vpop.f32.mrb[0].mxu0
        %680 = vmatprep.mubr.bf16.mxu0 0
        %681 = vmatmul.mubr.bf16.gmra.mrb[0].mxu0 %v453
        %v682 = vpop.f32.mrb[0].mxu0
        %v683 = vadd.f32 %v295, %v682
        %v684 = vpop.f32.mrb[0].mxu0
        %v685 = vpop.f32.mrb[0].mxu0
        %v686 = vadd.f32 %v295, %v685
        %v687 = vpop.f32.mrb[0].mxu0
        %688 = vmatprep.mubr.bf16.mxu0 0
        %689 = vmatmul.mubr.bf16.gmra.mrb[0].mxu0 %v456
        %v690 = vpop.f32.mrb[0].mxu0
        %v691 = vadd.f32 %v295, %v690
        %v692 = vpop.f32.mrb[0].mxu0
        %v693 = vpop.f32.mrb[0].mxu0
        %v694 = vadd.f32 %v295, %v693
        %v695 = vpop.f32.mrb[0].mxu0
        %696 = vmatprep.mubr.bf16.mxu0 0
        %697 = vmatmul.mubr.bf16.gmra.mrb[0].mxu0 %v459
        %v698 = vpop.f32.mrb[0].mxu0
        %v699 = vadd.f32 %v295, %v698
        %v700 = vpop.f32.mrb[0].mxu0
        %v701 = vpop.f32.mrb[0].mxu0
        %v702 = vadd.f32 %v295, %v701
        %v703 = vpop.f32.mrb[0].mxu0
        %704 = vmatprep.mubr.bf16.mxu0 0
        %705 = vmatmul.mubr.bf16.gmra.mrb[0].mxu0 %v462
        %v706 = vpop.f32.mrb[0].mxu0
        %v707 = vadd.f32 %v295, %v706
        %v708 = vpop.f32.mrb[0].mxu0
        %v709 = vpop.f32.mrb[0].mxu0
        %v710 = vadd.f32 %v295, %v709
        %v711 = vpop.f32.mrb[0].mxu0
        %712 = vmatprep.mubr.bf16.mxu0 0
        %713 = vmatmul.mubr.bf16.gmra.mrb[0].mxu0 %v465
        %v714 = vpop.f32.mrb[0].mxu0
        %v715 = vadd.f32 %v295, %v714
        %v716 = vpop.f32.mrb[0].mxu0
        %v717 = vpop.f32.mrb[0].mxu0
        %v718 = vadd.f32 %v295, %v717
        %v719 = vpop.f32.mrb[0].mxu0
        %720 = vmatprep.mubr.bf16.mxu0 0
        %721 = vmatmul.mubr.bf16.gmra.mrb[0].mxu0 %v468
        %v722 = vpop.f32.mrb[0].mxu0
        %v723 = vadd.f32 %v295, %v722
        %v724 = vpop.f32.mrb[0].mxu0
        %v725 = vpop.f32.mrb[0].mxu0
        %v726 = vadd.f32 %v295, %v725
        %v727 = vpop.f32.mrb[0].mxu0
        %728 = vmatprep.mubr.bf16.mxu0 0
        %729 = vmatmul.mubr.bf16.gmra.mrb[0].mxu0 %v471
        %v730 = vpop.f32.mrb[0].mxu0
        %v731 = vadd.f32 %v295, %v730
        %v732 = vpop.f32.mrb[0].mxu0
        %v733 = vpop.f32.mrb[0].mxu0
        %v734 = vadd.f32 %v295, %v733
        %v735 = vpop.f32.mrb[0].mxu0
        %736 = vmatprep.mubr.bf16.mxu0 0
        %737 = vmatmul.mubr.bf16.gmra.mrb[0].mxu0 %v474
        %v738 = vpop.f32.mrb[0].mxu0
        %v739 = vadd.f32 %v295, %v738
        %v740 = vpop.f32.mrb[0].mxu0
        %v741 = vpop.f32.mrb[0].mxu0
        %v742 = vadd.f32 %v295, %v741
        %v743 = vpop.f32.mrb[0].mxu0
        %744 = vmatprep.mubr.bf16.mxu0 0
        %745 = vmatmul.mubr.bf16.gmra.mrb[0].mxu0 %v477
        %v746 = vpop.f32.mrb[0].mxu0
        %v747 = vadd.f32 %v295, %v746
        %v748 = vpop.f32.mrb[0].mxu0
        %v749 = vpop.f32.mrb[0].mxu0
        %v750 = vadd.f32 %v295, %v749
        %v751 = vpop.f32.mrb[0].mxu0
        %752 = vmatprep.mubr.bf16.mxu0 0
        %753 = vmatmul.mubr.bf16.gmra.mrb[0].mxu0 %v480
        %v754 = vpop.f32.mrb[0].mxu0
        %v755 = vadd.f32 %v295, %v754
        %v756 = vpop.f32.mrb[0].mxu0
        %v757 = vpop.f32.mrb[0].mxu0
        %v758 = vadd.f32 %v295, %v757
        %v759 = vpop.f32.mrb[0].mxu0
        %760 = vmatprep.mubr.bf16.mxu0 0
        %761 = vmatmul.mubr.bf16.gmra.mrb[0].mxu0 %v483
        %v762 = vpop.f32.mrb[0].mxu0
        %v763 = vadd.f32 %v295, %v762
        %v764 = vpop.f32.mrb[0].mxu0
        %v765 = vpop.f32.mrb[0].mxu0
        %v766 = vadd.f32 %v295, %v765
        %v767 = vpop.f32.mrb[0].mxu0
        %768 = vmatprep.mubr.bf16.mxu0 0
        %769 = vmatmul.mubr.bf16.gmra.mrb[0].mxu0 %v486
        %v770 = vpop.f32.mrb[0].mxu0
        %v771 = vadd.f32 %v295, %v770
        %v772 = vpop.f32.mrb[0].mxu0
        %v773 = vpop.f32.mrb[0].mxu0
        %v774 = vadd.f32 %v295, %v773
        %v775 = vpop.f32.mrb[0].mxu0
        %776 = vdwg.mxu0
        %v777 = vtanh.pop %v523
        %v778 = vtanh.pop %v526
        %v779 = vtanh.pop %v531
        %v780 = vtanh.pop %v534
        %v781 = vtanh.pop %v539
        %v782 = vtanh.pop %v542
        %v783 = vtanh.pop %v547
        %v784 = vtanh.pop %v550
        %v785 = vtanh.pop %v555
        %v786 = vtanh.pop %v558
        %v787 = vtanh.pop %v563
        %v788 = vtanh.pop %v566
        %v789 = vtanh.pop %v571
        %v790 = vtanh.pop %v574
        %v791 = vtanh.pop %v579
        %v792 = vtanh.pop %v582
        %v793 = vtanh.pop %v587
        %v794 = vtanh.pop %v590
        %v795 = vtanh.pop %v595
        %v796 = vtanh.pop %v598
        %v797 = vtanh.pop %v603
        %v798 = vtanh.pop %v606
        %v799 = vtanh.pop %v611
        %v800 = vtanh.pop %v614
        %v801 = vtanh.pop %v619
        %v802 = vtanh.pop %v622
        %v803 = vtanh.pop %v627
        %v804 = vtanh.pop %v630
        %v805 = vtanh.pop %v635
        %v806 = vtanh.pop %v638
        %v807 = vtanh.pop %v643
        %v808 = vtanh.pop %v646
        %v809 = vtanh.pop %v651
        %v810 = vtanh.pop %v654
        %v811 = vtanh.pop %v659
        %v812 = vtanh.pop %v662
        %v813 = vtanh.pop %v667
        %v814 = vtanh.pop %v670
        %v815 = vtanh.pop %v675
        %v816 = vtanh.pop %v678
        %v817 = vtanh.pop %v683
        %v818 = vtanh.pop %v686
        %v819 = vtanh.pop %v691
        %v820 = vtanh.pop %v694
        %v821 = vtanh.pop %v699
        %v822 = vtanh.pop %v702
        %v823 = vtanh.pop %v707
        %v824 = vtanh.pop %v710
        %v825 = vtanh.pop %v715
        %v826 = vtanh.pop %v718
        %v827 = vtanh.pop %v723
        %v828 = vtanh.pop %v726
        %v829 = vtanh.pop %v731
        %v830 = vtanh.pop %v734
        %v831 = vtanh.pop %v739
        %v832 = vtanh.pop %v742
        %v833 = vtanh.pop %v747
        %v834 = vtanh.pop %v750
        %v835 = vtanh.pop %v755
        %v836 = vtanh.pop %v758
        %v837 = vtanh.pop %v763
        %v838 = vtanh.pop %v766
        %v839 = vtanh.pop %v771
        %v840 = vtanh.pop %v774
        %841 = vst [vmem:[%s217] sm:$0xff] %v777
        %842 = vst [vmem:[%s217 + $0x8] sm:$0xff] %v778
        %843 = vst [vmem:[%s217 + $0x10] sm:$0xff] %v779
        %844 = vst [vmem:[%s217 + $0x18] sm:$0xff] %v780
        %845 = vst [vmem:[%s217 + $0x20] sm:$0xff] %v781
        %846 = vst [vmem:[%s217 + $0x28] sm:$0xff] %v782
        %847 = vst [vmem:[%s217 + $0x30] sm:$0xff] %v783
        %848 = vst [vmem:[%s217 + $0x38] sm:$0xff] %v784
        %849 = vst [vmem:[%s217 + $0x40] sm:$0xff] %v785
        %850 = vst [vmem:[%s217 + $0x48] sm:$0xff] %v786
        %851 = vst [vmem:[%s217 + $0x50] sm:$0xff] %v787
        %852 = vst [vmem:[%s217 + $0x58] sm:$0xff] %v788
        %853 = vst [vmem:[%s217 + $0x60] sm:$0xff] %v789
        %854 = vst [vmem:[%s217 + $0x68] sm:$0xff] %v790
        %855 = vst [vmem:[%s217 + $0x70] sm:$0xff] %v791
        %856 = vst [vmem:[%s217 + $0x78] sm:$0xff] %v792
        %857 = vst [vmem:[%s217 + $0x80] sm:$0xff] %v793
        %858 = vst [vmem:[%s217 + $0x88] sm:$0xff] %v794
        %859 = vst [vmem:[%s217 + $0x90] sm:$0xff] %v795
        %860 = vst [vmem:[%s217 + $0x98] sm:$0xff] %v796
        %861 = vst [vmem:[%s217 + $0xa0] sm:$0xff] %v797
        %862 = vst [vmem:[%s217 + $0xa8] sm:$0xff] %v798
        %863 = vst [vmem:[%s217 + $0xb0] sm:$0xff] %v799
        %864 = vst [vmem:[%s217 + $0xb8] sm:$0xff] %v800
        %865 = vst [vmem:[%s217 + $0xc0] sm:$0xff] %v801
        %866 = vst [vmem:[%s217 + $0xc8] sm:$0xff] %v802
        %867 = vst [vmem:[%s217 + $0xd0] sm:$0xff] %v803
        %868 = vst [vmem:[%s217 + $0xd8] sm:$0xff] %v804
        %869 = vst [vmem:[%s217 + $0xe0] sm:$0xff] %v805
        %870 = vst [vmem:[%s217 + $0xe8] sm:$0xff] %v806
        %871 = vst [vmem:[%s217 + $0xf0] sm:$0xff] %v807
        %872 = vst [vmem:[%s217 + $0xf8] sm:$0xff] %v808
        %873 = vst [vmem:[%s217 + $0x100] sm:$0xff] %v809
        %874 = vst [vmem:[%s217 + $0x108] sm:$0xff] %v810
        %875 = vst [vmem:[%s217 + $0x110] sm:$0xff] %v811
        %876 = vst [vmem:[%s217 + $0x118] sm:$0xff] %v812
        %877 = vst [vmem:[%s217 + $0x120] sm:$0xff] %v813
        %878 = vst [vmem:[%s217 + $0x128] sm:$0xff] %v814
        %879 = vst [vmem:[%s217 + $0x130] sm:$0xff] %v815
        %880 = vst [vmem:[%s217 + $0x138] sm:$0xff] %v816
        %881 = vst [vmem:[%s217 + $0x140] sm:$0xff] %v817
        %882 = vst [vmem:[%s217 + $0x148] sm:$0xff] %v818
        %883 = vst [vmem:[%s217 + $0x150] sm:$0xff] %v819
        %884 = vst [vmem:[%s217 + $0x158] sm:$0xff] %v820
        %885 = vst [vmem:[%s217 + $0x160] sm:$0xff] %v821
        %886 = vst [vmem:[%s217 + $0x168] sm:$0xff] %v822
        %887 = vst [vmem:[%s217 + $0x170] sm:$0xff] %v823
        %888 = vst [vmem:[%s217 + $0x178] sm:$0xff] %v824
        %889 = vst [vmem:[%s217 + $0x180] sm:$0xff] %v825
        %890 = vst [vmem:[%s217 + $0x188] sm:$0xff] %v826
        %891 = vst [vmem:[%s217 + $0x190] sm:$0xff] %v827
        %892 = vst [vmem:[%s217 + $0x198] sm:$0xff] %v828
        %893 = vst [vmem:[%s217 + $0x1a0] sm:$0xff] %v829
        %894 = vst [vmem:[%s217 + $0x1a8] sm:$0xff] %v830
        %895 = vst [vmem:[%s217 + $0x1b0] sm:$0xff] %v831
        %896 = vst [vmem:[%s217 + $0x1b8] sm:$0xff] %v832
        %897 = vst [vmem:[%s217 + $0x1c0] sm:$0xff] %v833
        %898 = vst [vmem:[%s217 + $0x1c8] sm:$0xff] %v834
        %899 = vst [vmem:[%s217 + $0x1d0] sm:$0xff] %v835
        %900 = vst [vmem:[%s217 + $0x1d8] sm:$0xff] %v836
        %901 = vst [vmem:[%s217 + $0x1e0] sm:$0xff] %v837
        %902 = vst [vmem:[%s217 + $0x1e8] sm:$0xff] %v838
        %903 = vst [vmem:[%s217 + $0x1f0] sm:$0xff] %v839
        %904 = vst [vmem:[%s217 + $0x1f8] sm:$0xff] %v840
        %s905 = scalar_lea.vmem %s181, 32 [#allocation2]
        %v906 = vld [vmem:[%s905] sm:$0xff]
        %v907 = vld [vmem:[%s905 + $0x8] sm:$0xff]
        %v908 = vld [vmem:[%s905 + $0x10] sm:$0xff]
        %v909 = vld [vmem:[%s905 + $0x18] sm:$0xff]
        %v910 = vld [vmem:[%s905 + $0x40] sm:$0xff]
        %v911 = vld [vmem:[%s905 + $0x48] sm:$0xff]
        %v912 = vld [vmem:[%s905 + $0x50] sm:$0xff]
        %v913 = vld [vmem:[%s905 + $0x58] sm:$0xff]
        %v914 = vld [vmem:[%s905 + $0x80] sm:$0xff]
        %v915 = vld [vmem:[%s905 + $0x88] sm:$0xff]
        %v916 = vld [vmem:[%s905 + $0x90] sm:$0xff]
        %v917 = vld [vmem:[%s905 + $0x98] sm:$0xff]
        %v918 = vld [vmem:[%s905 + $0xc0] sm:$0xff]
        %v919 = vld [vmem:[%s905 + $0xc8] sm:$0xff]
        %v920 = vld [vmem:[%s905 + $0xd0] sm:$0xff]
        %v921 = vld [vmem:[%s905 + $0xd8] sm:$0xff]
        %v922 = vld [vmem:[%s905 + $0x100] sm:$0xff]
        %v923 = vld [vmem:[%s905 + $0x108] sm:$0xff]
        %v924 = vld [vmem:[%s905 + $0x110] sm:$0xff]
        %v925 = vld [vmem:[%s905 + $0x118] sm:$0xff]
        %v926 = vld [vmem:[%s905 + $0x140] sm:$0xff]
        %v927 = vld [vmem:[%s905 + $0x148] sm:$0xff]
        %v928 = vld [vmem:[%s905 + $0x150] sm:$0xff]
        %v929 = vld [vmem:[%s905 + $0x158] sm:$0xff]
        %v930 = vld [vmem:[%s905 + $0x180] sm:$0xff]
        %v931 = vld [vmem:[%s905 + $0x188] sm:$0xff]
        %v932 = vld [vmem:[%s905 + $0x190] sm:$0xff]
        %v933 = vld [vmem:[%s905 + $0x198] sm:$0xff]
        %v934 = vld [vmem:[%s905 + $0x1c0] sm:$0xff]
        %v935 = vld [vmem:[%s905 + $0x1c8] sm:$0xff]
        %v936 = vld [vmem:[%s905 + $0x1d0] sm:$0xff]
        %v937 = vld [vmem:[%s905 + $0x1d8] sm:$0xff]
        %v938 = vld [vmem:[%s905 + $0x200] sm:$0xff]
        %v939 = vld [vmem:[%s905 + $0x208] sm:$0xff]
        %v940 = vld [vmem:[%s905 + $0x210] sm:$0xff]
        %v941 = vld [vmem:[%s905 + $0x218] sm:$0xff]
        %v942 = vld [vmem:[%s905 + $0x240] sm:$0xff]
        %v943 = vld [vmem:[%s905 + $0x248] sm:$0xff]
        %v944 = vld [vmem:[%s905 + $0x250] sm:$0xff]
        %v945 = vld [vmem:[%s905 + $0x258] sm:$0xff]
        %v946 = vpack.c.bf16 %v910, %v906
        %v947 = vpack.c.bf16 %v911, %v907
        %v948 = vpack.c.bf16 %v912, %v908
        %v949 = vpack.c.bf16 %v913, %v909
        %v950 = vpack.c.bf16 %v918, %v914
        %v951 = vpack.c.bf16 %v919, %v915
        %v952 = vpack.c.bf16 %v920, %v916
        %v953 = vpack.c.bf16 %v921, %v917
        %v954 = vpack.c.bf16 %v926, %v922
        %v955 = vpack.c.bf16 %v927, %v923
        %v956 = vpack.c.bf16 %v928, %v924
        %v957 = vpack.c.bf16 %v929, %v925
        %v958 = vpack.c.bf16 %v934, %v930
        %v959 = vpack.c.bf16 %v935, %v931
        %v960 = vpack.c.bf16 %v936, %v932
        %v961 = vpack.c.bf16 %v937, %v933
        %v962 = vpack.c.bf16 %v942, %v938
        %v963 = vpack.c.bf16 %v943, %v939
        %v964 = vpack.c.bf16 %v944, %v940
        %v965 = vpack.c.bf16 %v945, %v941
        %966 = vxpose.xlu0.c.b16.start [1/8] %v946, 128
        %967 = vxpose.xlu0.c.b16.cont [2/8] %v950, 128
        %968 = vxpose.xlu0.c.b16.cont [3/8] %v954, 128
        %969 = vxpose.xlu0.c.b16.cont [4/8] %v958, 128
        %970 = vxpose.xlu0.c.b16.cont [5/8] %v962, 128
        %971 = vxpose.xlu0.c.b16.cont [6/8] 0, 128
        %972 = vxpose.xlu0.c.b16.cont [7/8] 0, 128
        %973 = vxpose.xlu0.c.b16.end [8/8] 0, 128
        %v974 = vpop.trf.xlu0
        %v975 = vpop.trf.xlu0
        %v976 = vpop.trf.xlu0
        %v977 = vpop.trf.xlu0
        %v978 = vpop.trf.xlu0
        %v979 = vpop.trf.xlu0
        %v980 = vpop.trf.xlu0
        %v981 = vpop.trf.xlu0
        %982 = vxpose.xlu0.c.b16.start [1/8] %v947, 128
        %983 = vxpose.xlu0.c.b16.cont [2/8] %v951, 128
        %984 = vxpose.xlu0.c.b16.cont [3/8] %v955, 128
        %985 = vxpose.xlu0.c.b16.cont [4/8] %v959, 128
        %986 = vxpose.xlu0.c.b16.cont [5/8] %v963, 128
        %987 = vxpose.xlu0.c.b16.cont [6/8] 0, 128
        %988 = vxpose.xlu0.c.b16.cont [7/8] 0, 128
        %989 = vxpose.xlu0.c.b16.end [8/8] 0, 128
        %v990 = vpop.trf.xlu0
        %v991 = vpop.trf.xlu0
        %v992 = vpop.trf.xlu0
        %v993 = vpop.trf.xlu0
        %v994 = vpop.trf.xlu0
        %v995 = vpop.trf.xlu0
        %v996 = vpop.trf.xlu0
        %v997 = vpop.trf.xlu0
        %998 = vxpose.xlu0.c.b16.start [1/8] %v948, 128
        %999 = vxpose.xlu0.c.b16.cont [2/8] %v952, 128
        %1000 = vxpose.xlu0.c.b16.cont [3/8] %v956, 128
        %1001 = vxpose.xlu0.c.b16.cont [4/8] %v960, 128
        %1002 = vxpose.xlu0.c.b16.cont [5/8] %v964, 128
        %1003 = vxpose.xlu0.c.b16.cont [6/8] 0, 128
        %1004 = vxpose.xlu0.c.b16.cont [7/8] 0, 128
        %1005 = vxpose.xlu0.c.b16.end [8/8] 0, 128
        %v1006 = vpop.trf.xlu0
        %v1007 = vpop.trf.xlu0
        %v1008 = vpop.trf.xlu0
        %v1009 = vpop.trf.xlu0
        %v1010 = vpop.trf.xlu0
        %v1011 = vpop.trf.xlu0
        %v1012 = vpop.trf.xlu0
        %v1013 = vpop.trf.xlu0
        %1014 = vxpose.xlu0.c.b16.start [1/8] %v949, 128
        %1015 = vxpose.xlu0.c.b16.cont [2/8] %v953, 128
        %1016 = vxpose.xlu0.c.b16.cont [3/8] %v957, 128
        %1017 = vxpose.xlu0.c.b16.cont [4/8] %v961, 128
        %1018 = vxpose.xlu0.c.b16.cont [5/8] %v965, 128
        %1019 = vxpose.xlu0.c.b16.cont [6/8] 0, 128
        %1020 = vxpose.xlu0.c.b16.cont [7/8] 0, 128
        %1021 = vxpose.xlu0.c.b16.end [8/8] 0, 128
        %v1022 = vpop.trf.xlu0
        %v1023 = vpop.trf.xlu0
        %v1024 = vpop.trf.xlu0
        %v1025 = vpop.trf.xlu0
        %v1026 = vpop.trf.xlu0
        %v1027 = vpop.trf.xlu0
        %v1028 = vpop.trf.xlu0
        %v1029 = vpop.trf.xlu0
        %v1031 = vsel %vm391, %v974, 0
        %v1034 = vsel %vm391, %v975, 0
        %v1037 = vsel %vm391, %v976, 0
        %v1040 = vsel %vm391, %v977, 0
        %v1043 = vsel %vm391, %v978, 0
        %v1046 = vsel %vm391, %v979, 0
        %v1049 = vsel %vm391, %v980, 0
        %v1052 = vsel %vm391, %v981, 0
        %v1055 = vsel %vm391, %v990, 0
        %v1058 = vsel %vm391, %v991, 0
        %v1061 = vsel %vm391, %v992, 0
        %v1064 = vsel %vm391, %v993, 0
        %v1067 = vsel %vm391, %v994, 0
        %v1070 = vsel %vm391, %v995, 0
        %v1073 = vsel %vm391, %v996, 0
        %v1076 = vsel %vm391, %v997, 0
        %v1079 = vsel %vm391, %v1006, 0
        %v1082 = vsel %vm391, %v1007, 0
        %v1085 = vsel %vm391, %v1008, 0
        %v1088 = vsel %vm391, %v1009, 0
        %v1091 = vsel %vm391, %v1010, 0
        %v1094 = vsel %vm391, %v1011, 0
        %v1097 = vsel %vm391, %v1012, 0
        %v1100 = vsel %vm391, %v1013, 0
        %v1103 = vsel %vm391, %v1022, 0
        %v1106 = vsel %vm391, %v1023, 0
        %v1109 = vsel %vm391, %v1024, 0
        %v1112 = vsel %vm391, %v1025, 0
        %v1115 = vsel %vm391, %v1026, 0
        %v1118 = vsel %vm391, %v1027, 0
        %v1121 = vsel %vm391, %v1028, 0
        %v1124 = vsel %vm391, %v1029, 0
        %1126 = vmatprep.subr.bf16.mxu0 0
        %1127 = vmatpush1.bf16.msra.mxu0 %v381
        %1128 = vmatprep.subr.bf16.mxu0 0
        %1129 = vmatpush1.bf16.msra.mxu0 %v382
        %1130 = vmatprep.subr.bf16.mxu0 0
        %1131 = vmatpush1.bf16.msra.mxu0 %v383
        %1132 = vmatprep.subr.bf16.mxu0 0
        %1133 = vmatpush1.bf16.msra.mxu0 %v384
        %1134 = vmatprep.subr.bf16.mxu0 0
        %1135 = vmatpush1.bf16.msra.mxu0 %v385
        %1136 = vmatprep.subr.bf16.mxu0 0
        %1137 = vmatpush1.bf16.msra.mxu0 0
        %1138 = vmatprep.subr.bf16.mxu0 0
        %1139 = vmatpush1.bf16.msra.mxu0 0
        %1140 = vmatprep.subr.bf16.mxu0 0
        %1141 = vmatpush1.bf16.msra.mxu0 0
        %1142 = vmatprep.subr.bf16.mxu0 0
        %1143 = vmatpush1.bf16.msra.mxu0 0
        %1144 = vmatprep.subr.bf16.mxu0 0
        %1145 = vmatpush1.bf16.msra.mxu0 0
        %1146 = vmatprep.subr.bf16.mxu0 0
        %1147 = vmatpush1.bf16.msra.mxu0 0
        %1148 = vmatprep.subr.bf16.mxu0 0
        %1149 = vmatpush1.bf16.msra.mxu0 0
        %1150 = vmatprep.subr.bf16.mxu0 0
        %1151 = vmatpush1.bf16.msra.mxu0 0
        %1152 = vmatprep.subr.bf16.mxu0 0
        %1153 = vmatpush1.bf16.msra.mxu0 0
        %1154 = vmatprep.subr.bf16.mxu0 0
        %1155 = vmatpush1.bf16.msra.mxu0 0
        %1156 = vmatprep.subr.bf16.mxu0 0
        %1157 = vmatpush1.bf16.msra.mxu0 0
        %1158 = vmatprep.mubr.bf16.mxu0 0
        %1159 = vmatmul.mubr.bf16.gmra.mrb[0].mxu0 %v1031
        %v1160 = vpop.f32.mrb[0].mxu0
        %v1161 = vadd.f32 %v295, %v1160
        %v1162 = vpop.f32.mrb[0].mxu0
        %v1163 = vpop.f32.mrb[0].mxu0
        %v1164 = vadd.f32 %v295, %v1163
        %v1165 = vpop.f32.mrb[0].mxu0
        %1166 = vmatprep.mubr.bf16.mxu0 0
        %1167 = vmatmul.mubr.bf16.gmra.mrb[0].mxu0 %v1034
        %v1168 = vpop.f32.mrb[0].mxu0
        %v1169 = vadd.f32 %v295, %v1168
        %v1170 = vpop.f32.mrb[0].mxu0
        %v1171 = vpop.f32.mrb[0].mxu0
        %v1172 = vadd.f32 %v295, %v1171
        %v1173 = vpop.f32.mrb[0].mxu0
        %1174 = vmatprep.mubr.bf16.mxu0 0
        %1175 = vmatmul.mubr.bf16.gmra.mrb[0].mxu0 %v1037
        %v1176 = vpop.f32.mrb[0].mxu0
        %v1177 = vadd.f32 %v295, %v1176
        %v1178 = vpop.f32.mrb[0].mxu0
        %v1179 = vpop.f32.mrb[0].mxu0
        %v1180 = vadd.f32 %v295, %v1179
        %v1181 = vpop.f32.mrb[0].mxu0
        %1182 = vmatprep.mubr.bf16.mxu0 0
        %1183 = vmatmul.mubr.bf16.gmra.mrb[0].mxu0 %v1040
        %v1184 = vpop.f32.mrb[0].mxu0
        %v1185 = vadd.f32 %v295, %v1184
        %v1186 = vpop.f32.mrb[0].mxu0
        %v1187 = vpop.f32.mrb[0].mxu0
        %v1188 = vadd.f32 %v295, %v1187
        %v1189 = vpop.f32.mrb[0].mxu0
        %1190 = vmatprep.mubr.bf16.mxu0 0
        %1191 = vmatmul.mubr.bf16.gmra.mrb[0].mxu0 %v1043
        %v1192 = vpop.f32.mrb[0].mxu0
        %v1193 = vadd.f32 %v295, %v1192
        %v1194 = vpop.f32.mrb[0].mxu0
        %v1195 = vpop.f32.mrb[0].mxu0
        %v1196 = vadd.f32 %v295, %v1195
        %v1197 = vpop.f32.mrb[0].mxu0
        %1198 = vmatprep.mubr.bf16.mxu0 0
        %1199 = vmatmul.mubr.bf16.gmra.mrb[0].mxu0 %v1046
        %v1200 = vpop.f32.mrb[0].mxu0
        %v1201 = vadd.f32 %v295, %v1200
        %v1202 = vpop.f32.mrb[0].mxu0
        %v1203 = vpop.f32.mrb[0].mxu0
        %v1204 = vadd.f32 %v295, %v1203
        %v1205 = vpop.f32.mrb[0].mxu0
        %1206 = vmatprep.mubr.bf16.mxu0 0
        %1207 = vmatmul.mubr.bf16.gmra.mrb[0].mxu0 %v1049
        %v1208 = vpop.f32.mrb[0].mxu0
        %v1209 = vadd.f32 %v295, %v1208
        %v1210 = vpop.f32.mrb[0].mxu0
        %v1211 = vpop.f32.mrb[0].mxu0
        %v1212 = vadd.f32 %v295, %v1211
        %v1213 = vpop.f32.mrb[0].mxu0
        %1214 = vmatprep.mubr.bf16.mxu0 0
        %1215 = vmatmul.mubr.bf16.gmra.mrb[0].mxu0 %v1052
        %v1216 = vpop.f32.mrb[0].mxu0
        %v1217 = vadd.f32 %v295, %v1216
        %v1218 = vpop.f32.mrb[0].mxu0
        %v1219 = vpop.f32.mrb[0].mxu0
        %v1220 = vadd.f32 %v295, %v1219
        %v1221 = vpop.f32.mrb[0].mxu0
        %1222 = vmatprep.mubr.bf16.mxu0 0
        %1223 = vmatmul.mubr.bf16.gmra.mrb[0].mxu0 %v1055
        %v1224 = vpop.f32.mrb[0].mxu0
        %v1225 = vadd.f32 %v295, %v1224
        %v1226 = vpop.f32.mrb[0].mxu0
        %v1227 = vpop.f32.mrb[0].mxu0
        %v1228 = vadd.f32 %v295, %v1227
        %v1229 = vpop.f32.mrb[0].mxu0
        %1230 = vmatprep.mubr.bf16.mxu0 0
        %1231 = vmatmul.mubr.bf16.gmra.mrb[0].mxu0 %v1058
        %v1232 = vpop.f32.mrb[0].mxu0
        %v1233 = vadd.f32 %v295, %v1232
        %v1234 = vpop.f32.mrb[0].mxu0
        %v1235 = vpop.f32.mrb[0].mxu0
        %v1236 = vadd.f32 %v295, %v1235
        %v1237 = vpop.f32.mrb[0].mxu0
        %1238 = vmatprep.mubr.bf16.mxu0 0
        %1239 = vmatmul.mubr.bf16.gmra.mrb[0].mxu0 %v1061
        %v1240 = vpop.f32.mrb[0].mxu0
        %v1241 = vadd.f32 %v295, %v1240
        %v1242 = vpop.f32.mrb[0].mxu0
        %v1243 = vpop.f32.mrb[0].mxu0
        %v1244 = vadd.f32 %v295, %v1243
        %v1245 = vpop.f32.mrb[0].mxu0
        %1246 = vmatprep.mubr.bf16.mxu0 0
        %1247 = vmatmul.mubr.bf16.gmra.mrb[0].mxu0 %v1064
        %v1248 = vpop.f32.mrb[0].mxu0
        %v1249 = vadd.f32 %v295, %v1248
        %v1250 = vpop.f32.mrb[0].mxu0
        %v1251 = vpop.f32.mrb[0].mxu0
        %v1252 = vadd.f32 %v295, %v1251
        %v1253 = vpop.f32.mrb[0].mxu0
        %1254 = vmatprep.mubr.bf16.mxu0 0
        %1255 = vmatmul.mubr.bf16.gmra.mrb[0].mxu0 %v1067
        %v1256 = vpop.f32.mrb[0].mxu0
        %v1257 = vadd.f32 %v295, %v1256
        %v1258 = vpop.f32.mrb[0].mxu0
        %v1259 = vpop.f32.mrb[0].mxu0
        %v1260 = vadd.f32 %v295, %v1259
        %v1261 = vpop.f32.mrb[0].mxu0
        %1262 = vmatprep.mubr.bf16.mxu0 0
        %1263 = vmatmul.mubr.bf16.gmra.mrb[0].mxu0 %v1070
        %v1264 = vpop.f32.mrb[0].mxu0
        %v1265 = vadd.f32 %v295, %v1264
        %v1266 = vpop.f32.mrb[0].mxu0
        %v1267 = vpop.f32.mrb[0].mxu0
        %v1268 = vadd.f32 %v295, %v1267
        %v1269 = vpop.f32.mrb[0].mxu0
        %1270 = vmatprep.mubr.bf16.mxu0 0
        %1271 = vmatmul.mubr.bf16.gmra.mrb[0].mxu0 %v1073
        %v1272 = vpop.f32.mrb[0].mxu0
        %v1273 = vadd.f32 %v295, %v1272
        %v1274 = vpop.f32.mrb[0].mxu0
        %v1275 = vpop.f32.mrb[0].mxu0
        %v1276 = vadd.f32 %v295, %v1275
        %v1277 = vpop.f32.mrb[0].mxu0
        %1278 = vmatprep.mubr.bf16.mxu0 0
        %1279 = vmatmul.mubr.bf16.gmra.mrb[0].mxu0 %v1076
        %v1280 = vpop.f32.mrb[0].mxu0
        %v1281 = vadd.f32 %v295, %v1280
        %v1282 = vpop.f32.mrb[0].mxu0
        %v1283 = vpop.f32.mrb[0].mxu0
        %v1284 = vadd.f32 %v295, %v1283
        %v1285 = vpop.f32.mrb[0].mxu0
        %1286 = vmatprep.mubr.bf16.mxu0 0
        %1287 = vmatmul.mubr.bf16.gmra.mrb[0].mxu0 %v1079
        %v1288 = vpop.f32.mrb[0].mxu0
        %v1289 = vadd.f32 %v295, %v1288
        %v1290 = vpop.f32.mrb[0].mxu0
        %v1291 = vpop.f32.mrb[0].mxu0
        %v1292 = vadd.f32 %v295, %v1291
        %v1293 = vpop.f32.mrb[0].mxu0
        %1294 = vmatprep.mubr.bf16.mxu0 0
        %1295 = vmatmul.mubr.bf16.gmra.mrb[0].mxu0 %v1082
        %v1296 = vpop.f32.mrb[0].mxu0
        %v1297 = vadd.f32 %v295, %v1296
        %v1298 = vpop.f32.mrb[0].mxu0
        %v1299 = vpop.f32.mrb[0].mxu0
        %v1300 = vadd.f32 %v295, %v1299
        %v1301 = vpop.f32.mrb[0].mxu0
        %1302 = vmatprep.mubr.bf16.mxu0 0
        %1303 = vmatmul.mubr.bf16.gmra.mrb[0].mxu0 %v1085
        %v1304 = vpop.f32.mrb[0].mxu0
        %v1305 = vadd.f32 %v295, %v1304
        %v1306 = vpop.f32.mrb[0].mxu0
        %v1307 = vpop.f32.mrb[0].mxu0
        %v1308 = vadd.f32 %v295, %v1307
        %v1309 = vpop.f32.mrb[0].mxu0
        %1310 = vmatprep.mubr.bf16.mxu0 0
        %1311 = vmatmul.mubr.bf16.gmra.mrb[0].mxu0 %v1088
        %v1312 = vpop.f32.mrb[0].mxu0
        %v1313 = vadd.f32 %v295, %v1312
        %v1314 = vpop.f32.mrb[0].mxu0
        %v1315 = vpop.f32.mrb[0].mxu0
        %v1316 = vadd.f32 %v295, %v1315
        %v1317 = vpop.f32.mrb[0].mxu0
        %1318 = vmatprep.mubr.bf16.mxu0 0
        %1319 = vmatmul.mubr.bf16.gmra.mrb[0].mxu0 %v1091
        %v1320 = vpop.f32.mrb[0].mxu0
        %v1321 = vadd.f32 %v295, %v1320
        %v1322 = vpop.f32.mrb[0].mxu0
        %v1323 = vpop.f32.mrb[0].mxu0
        %v1324 = vadd.f32 %v295, %v1323
        %v1325 = vpop.f32.mrb[0].mxu0
        %1326 = vmatprep.mubr.bf16.mxu0 0
        %1327 = vmatmul.mubr.bf16.gmra.mrb[0].mxu0 %v1094
        %v1328 = vpop.f32.mrb[0].mxu0
        %v1329 = vadd.f32 %v295, %v1328
        %v1330 = vpop.f32.mrb[0].mxu0
        %v1331 = vpop.f32.mrb[0].mxu0
        %v1332 = vadd.f32 %v295, %v1331
        %v1333 = vpop.f32.mrb[0].mxu0
        %1334 = vmatprep.mubr.bf16.mxu0 0
        %1335 = vmatmul.mubr.bf16.gmra.mrb[0].mxu0 %v1097
        %v1336 = vpop.f32.mrb[0].mxu0
        %v1337 = vadd.f32 %v295, %v1336
        %v1338 = vpop.f32.mrb[0].mxu0
        %v1339 = vpop.f32.mrb[0].mxu0
        %v1340 = vadd.f32 %v295, %v1339
        %v1341 = vpop.f32.mrb[0].mxu0
        %1342 = vmatprep.mubr.bf16.mxu0 0
        %1343 = vmatmul.mubr.bf16.gmra.mrb[0].mxu0 %v1100
        %v1344 = vpop.f32.mrb[0].mxu0
        %v1345 = vadd.f32 %v295, %v1344
        %v1346 = vpop.f32.mrb[0].mxu0
        %v1347 = vpop.f32.mrb[0].mxu0
        %v1348 = vadd.f32 %v295, %v1347
        %v1349 = vpop.f32.mrb[0].mxu0
        %1350 = vmatprep.mubr.bf16.mxu0 0
        %1351 = vmatmul.mubr.bf16.gmra.mrb[0].mxu0 %v1103
        %v1352 = vpop.f32.mrb[0].mxu0
        %v1353 = vadd.f32 %v295, %v1352
        %v1354 = vpop.f32.mrb[0].mxu0
        %v1355 = vpop.f32.mrb[0].mxu0
        %v1356 = vadd.f32 %v295, %v1355
        %v1357 = vpop.f32.mrb[0].mxu0
        %1358 = vmatprep.mubr.bf16.mxu0 0
        %1359 = vmatmul.mubr.bf16.gmra.mrb[0].mxu0 %v1106
        %v1360 = vpop.f32.mrb[0].mxu0
        %v1361 = vadd.f32 %v295, %v1360
        %v1362 = vpop.f32.mrb[0].mxu0
        %v1363 = vpop.f32.mrb[0].mxu0
        %v1364 = vadd.f32 %v295, %v1363
        %v1365 = vpop.f32.mrb[0].mxu0
        %1366 = vmatprep.mubr.bf16.mxu0 0
        %1367 = vmatmul.mubr.bf16.gmra.mrb[0].mxu0 %v1109
        %v1368 = vpop.f32.mrb[0].mxu0
        %v1369 = vadd.f32 %v295, %v1368
        %v1370 = vpop.f32.mrb[0].mxu0
        %v1371 = vpop.f32.mrb[0].mxu0
        %v1372 = vadd.f32 %v295, %v1371
        %v1373 = vpop.f32.mrb[0].mxu0
        %1374 = vmatprep.mubr.bf16.mxu0 0
        %1375 = vmatmul.mubr.bf16.gmra.mrb[0].mxu0 %v1112
        %v1376 = vpop.f32.mrb[0].mxu0
        %v1377 = vadd.f32 %v295, %v1376
        %v1378 = vpop.f32.mrb[0].mxu0
        %v1379 = vpop.f32.mrb[0].mxu0
        %v1380 = vadd.f32 %v295, %v1379
        %v1381 = vpop.f32.mrb[0].mxu0
        %1382 = vmatprep.mubr.bf16.mxu0 0
        %1383 = vmatmul.mubr.bf16.gmra.mrb[0].mxu0 %v1115
        %v1384 = vpop.f32.mrb[0].mxu0
        %v1385 = vadd.f32 %v295, %v1384
        %v1386 = vpop.f32.mrb[0].mxu0
        %v1387 = vpop.f32.mrb[0].mxu0
        %v1388 = vadd.f32 %v295, %v1387
        %v1389 = vpop.f32.mrb[0].mxu0
        %1390 = vmatprep.mubr.bf16.mxu0 0
        %1391 = vmatmul.mubr.bf16.gmra.mrb[0].mxu0 %v1118
        %v1392 = vpop.f32.mrb[0].mxu0
        %v1393 = vadd.f32 %v295, %v1392
        %v1394 = vpop.f32.mrb[0].mxu0
        %v1395 = vpop.f32.mrb[0].mxu0
        %v1396 = vadd.f32 %v295, %v1395
        %v1397 = vpop.f32.mrb[0].mxu0
        %1398 = vmatprep.mubr.bf16.mxu0 0
        %1399 = vmatmul.mubr.bf16.gmra.mrb[0].mxu0 %v1121
        %v1400 = vpop.f32.mrb[0].mxu0
        %v1401 = vadd.f32 %v295, %v1400
        %v1402 = vpop.f32.mrb[0].mxu0
        %v1403 = vpop.f32.mrb[0].mxu0
        %v1404 = vadd.f32 %v295, %v1403
        %v1405 = vpop.f32.mrb[0].mxu0
        %1406 = vmatprep.mubr.bf16.mxu0 0
        %1407 = vmatmul.mubr.bf16.gmra.mrb[0].mxu0 %v1124
        %v1408 = vpop.f32.mrb[0].mxu0
        %v1409 = vadd.f32 %v295, %v1408
        %v1410 = vpop.f32.mrb[0].mxu0
        %v1411 = vpop.f32.mrb[0].mxu0
        %v1412 = vadd.f32 %v295, %v1411
        %v1413 = vpop.f32.mrb[0].mxu0
        %1414 = vdwg.mxu0
        %v1415 = vtanh.pop %v1161
        %v1416 = vtanh.pop %v1164
        %v1417 = vtanh.pop %v1169
        %v1418 = vtanh.pop %v1172
        %v1419 = vtanh.pop %v1177
        %v1420 = vtanh.pop %v1180
        %v1421 = vtanh.pop %v1185
        %v1422 = vtanh.pop %v1188
        %v1423 = vtanh.pop %v1193
        %v1424 = vtanh.pop %v1196
        %v1425 = vtanh.pop %v1201
        %v1426 = vtanh.pop %v1204
        %v1427 = vtanh.pop %v1209
        %v1428 = vtanh.pop %v1212
        %v1429 = vtanh.pop %v1217
        %v1430 = vtanh.pop %v1220
        %v1431 = vtanh.pop %v1225
        %v1432 = vtanh.pop %v1228
        %v1433 = vtanh.pop %v1233
        %v1434 = vtanh.pop %v1236
        %v1435 = vtanh.pop %v1241
        %v1436 = vtanh.pop %v1244
        %v1437 = vtanh.pop %v1249
        %v1438 = vtanh.pop %v1252
        %v1439 = vtanh.pop %v1257
        %v1440 = vtanh.pop %v1260
        %v1441 = vtanh.pop %v1265
        %v1442 = vtanh.pop %v1268
        %v1443 = vtanh.pop %v1273
        %v1444 = vtanh.pop %v1276
        %v1445 = vtanh.pop %v1281
        %v1446 = vtanh.pop %v1284
        %v1447 = vtanh.pop %v1289
        %v1448 = vtanh.pop %v1292
        %v1449 = vtanh.pop %v1297
        %v1450 = vtanh.pop %v1300
        %v1451 = vtanh.pop %v1305
        %v1452 = vtanh.pop %v1308
        %v1453 = vtanh.pop %v1313
        %v1454 = vtanh.pop %v1316
        %v1455 = vtanh.pop %v1321
        %v1456 = vtanh.pop %v1324
        %v1457 = vtanh.pop %v1329
        %v1458 = vtanh.pop %v1332
        %v1459 = vtanh.pop %v1337
        %v1460 = vtanh.pop %v1340
        %v1461 = vtanh.pop %v1345
        %v1462 = vtanh.pop %v1348
        %v1463 = vtanh.pop %v1353
        %v1464 = vtanh.pop %v1356
        %v1465 = vtanh.pop %v1361
        %v1466 = vtanh.pop %v1364
        %v1467 = vtanh.pop %v1369
        %v1468 = vtanh.pop %v1372
        %v1469 = vtanh.pop %v1377
        %v1470 = vtanh.pop %v1380
        %v1471 = vtanh.pop %v1385
        %v1472 = vtanh.pop %v1388
        %v1473 = vtanh.pop %v1393
        %v1474 = vtanh.pop %v1396
        %v1475 = vtanh.pop %v1401
        %v1476 = vtanh.pop %v1404
        %v1477 = vtanh.pop %v1409
        %v1478 = vtanh.pop %v1412
        %s1479 = scalar_lea.vmem %s217, 512
        %1480 = vst [vmem:[%s1479] sm:$0xff] %v1415
        %1481 = vst [vmem:[%s1479 + $0x8] sm:$0xff] %v1416
        %1482 = vst [vmem:[%s1479 + $0x10] sm:$0xff] %v1417
        %1483 = vst [vmem:[%s1479 + $0x18] sm:$0xff] %v1418
        %1484 = vst [vmem:[%s1479 + $0x20] sm:$0xff] %v1419
        %1485 = vst [vmem:[%s1479 + $0x28] sm:$0xff] %v1420
        %1486 = vst [vmem:[%s1479 + $0x30] sm:$0xff] %v1421
        %1487 = vst [vmem:[%s1479 + $0x38] sm:$0xff] %v1422
        %1488 = vst [vmem:[%s1479 + $0x40] sm:$0xff] %v1423
        %1489 = vst [vmem:[%s1479 + $0x48] sm:$0xff] %v1424
        %1490 = vst [vmem:[%s1479 + $0x50] sm:$0xff] %v1425
        %1491 = vst [vmem:[%s1479 + $0x58] sm:$0xff] %v1426
        %1492 = vst [vmem:[%s1479 + $0x60] sm:$0xff] %v1427
        %1493 = vst [vmem:[%s1479 + $0x68] sm:$0xff] %v1428
        %1494 = vst [vmem:[%s1479 + $0x70] sm:$0xff] %v1429
        %1495 = vst [vmem:[%s1479 + $0x78] sm:$0xff] %v1430
        %1496 = vst [vmem:[%s1479 + $0x80] sm:$0xff] %v1431
        %1497 = vst [vmem:[%s1479 + $0x88] sm:$0xff] %v1432
        %1498 = vst [vmem:[%s1479 + $0x90] sm:$0xff] %v1433
        %1499 = vst [vmem:[%s1479 + $0x98] sm:$0xff] %v1434
        %1500 = vst [vmem:[%s1479 + $0xa0] sm:$0xff] %v1435
        %1501 = vst [vmem:[%s1479 + $0xa8] sm:$0xff] %v1436
        %1502 = vst [vmem:[%s1479 + $0xb0] sm:$0xff] %v1437
        %1503 = vst [vmem:[%s1479 + $0xb8] sm:$0xff] %v1438
        %1504 = vst [vmem:[%s1479 + $0xc0] sm:$0xff] %v1439
        %1505 = vst [vmem:[%s1479 + $0xc8] sm:$0xff] %v1440
        %1506 = vst [vmem:[%s1479 + $0xd0] sm:$0xff] %v1441
        %1507 = vst [vmem:[%s1479 + $0xd8] sm:$0xff] %v1442
        %1508 = vst [vmem:[%s1479 + $0xe0] sm:$0xff] %v1443
        %1509 = vst [vmem:[%s1479 + $0xe8] sm:$0xff] %v1444
        %1510 = vst [vmem:[%s1479 + $0xf0] sm:$0xff] %v1445
        %1511 = vst [vmem:[%s1479 + $0xf8] sm:$0xff] %v1446
        %1512 = vst [vmem:[%s1479 + $0x100] sm:$0xff] %v1447
        %1513 = vst [vmem:[%s1479 + $0x108] sm:$0xff] %v1448
        %1514 = vst [vmem:[%s1479 + $0x110] sm:$0xff] %v1449
        %1515 = vst [vmem:[%s1479 + $0x118] sm:$0xff] %v1450
        %1516 = vst [vmem:[%s1479 + $0x120] sm:$0xff] %v1451
        %1517 = vst [vmem:[%s1479 + $0x128] sm:$0xff] %v1452
        %1518 = vst [vmem:[%s1479 + $0x130] sm:$0xff] %v1453
        %1519 = vst [vmem:[%s1479 + $0x138] sm:$0xff] %v1454
        %1520 = vst [vmem:[%s1479 + $0x140] sm:$0xff] %v1455
        %1521 = vst [vmem:[%s1479 + $0x148] sm:$0xff] %v1456
        %1522 = vst [vmem:[%s1479 + $0x150] sm:$0xff] %v1457
        %1523 = vst [vmem:[%s1479 + $0x158] sm:$0xff] %v1458
        %1524 = vst [vmem:[%s1479 + $0x160] sm:$0xff] %v1459
        %1525 = vst [vmem:[%s1479 + $0x168] sm:$0xff] %v1460
        %1526 = vst [vmem:[%s1479 + $0x170] sm:$0xff] %v1461
        %1527 = vst [vmem:[%s1479 + $0x178] sm:$0xff] %v1462
        %1528 = vst [vmem:[%s1479 + $0x180] sm:$0xff] %v1463
        %1529 = vst [vmem:[%s1479 + $0x188] sm:$0xff] %v1464
        %1530 = vst [vmem:[%s1479 + $0x190] sm:$0xff] %v1465
        %1531 = vst [vmem:[%s1479 + $0x198] sm:$0xff] %v1466
        %1532 = vst [vmem:[%s1479 + $0x1a0] sm:$0xff] %v1467
        %1533 = vst [vmem:[%s1479 + $0x1a8] sm:$0xff] %v1468
        %1534 = vst [vmem:[%s1479 + $0x1b0] sm:$0xff] %v1469
        %1535 = vst [vmem:[%s1479 + $0x1b8] sm:$0xff] %v1470
        %1536 = vst [vmem:[%s1479 + $0x1c0] sm:$0xff] %v1471
        %1537 = vst [vmem:[%s1479 + $0x1c8] sm:$0xff] %v1472
        %1538 = vst [vmem:[%s1479 + $0x1d0] sm:$0xff] %v1473
        %1539 = vst [vmem:[%s1479 + $0x1d8] sm:$0xff] %v1474
        %1540 = vst [vmem:[%s1479 + $0x1e0] sm:$0xff] %v1475
        %1541 = vst [vmem:[%s1479 + $0x1e8] sm:$0xff] %v1476
        %1542 = vst [vmem:[%s1479 + $0x1f0] sm:$0xff] %v1477
        %1543 = vst [vmem:[%s1479 + $0x1f8] sm:$0xff] %v1478
        %s1544 = smul.u32 128, %s21
        %p1545 = scmp.lt.s32.totalorder %s22, 1
        %s1546 = scalar_select %p1545, %s22, 1
        %p1547 = scmp.lt.s32.totalorder %s1544, 127
        %s1548 = scalar_select %p1547, %s1544, 127
        %s1549 = smul.addr %s1546, 128
        %s1550 = sadd.s32 %s1548, %s1549
        %s1551 = smul.addr %s1550, 8
        %s1552 = scalar_lea.vmem %s3, %s1551
        // Predicated region
        $region37: #{vocoder_forward.1} parent=31 // pred_check
          %p1553 = pneg %p119
        $region38: #{vocoder_forward.1} parent=31 // pred_check_branch
          %1555 = sbr.rel (%p1553) target = $region40
        $region39: #{vocoder_forward.1} parent=31 // pred_region
          %s1556 = smul.u32 128, %s21
        $region40: #{vocoder_forward.1} parent=31 // pred_fallthru
          _
      $region32: #{vocoder_forward.1} parent=5 // pred_fallthru
        _
      %p1557 = scmp.le.s32.totalorder 2, %s12
      // Predicated region
      $region41: #{vocoder_forward.1} parent=5 // pred_check
        %p1558 = pneg %p1557
      $region42: #{vocoder_forward.1} parent=5 // pred_check_branch
        %1560 = sbr.rel (%p1558) target = $region44
      $region43: #{vocoder_forward.1} parent=5 // pred_region
        %s1561 = ssub.s32 %s12, 2
        // Predicated region
        $region45: #{vocoder_forward.1} parent=43 // pred_check
          %p1562 = pneg %p125
        $region46: #{vocoder_forward.1} parent=43 // pred_check_branch
          %1564 = sbr.rel (%p1562) target = $region48
        $region47: #{vocoder_forward.1} parent=43 // pred_region
          %s1565 = smul.u32 128, %s23
          %p1566 = scmp.lt.s32.totalorder %s24, 1
          %s1567 = scalar_select %p1566, %s24, 1
          %p1568 = scmp.lt.s32.totalorder %s1565, 127
          %s1569 = scalar_select %p1568, %s1565, 127
          %s1570 = smul.addr %s1567, 128
          %s1571 = sadd.s32 %s1569, %s1570
          %s1572 = smul.addr %s1571, 8
          %s1573 = scalar_lea.vmem %s3, %s1572
        $region48: #{vocoder_forward.1} parent=43 // pred_fallthru
          _
      $region44: #{vocoder_forward.1} parent=5 // pred_fallthru
        _
    $region6: #{vocoder_forward.1} parent=1 // loop_footer
      %s16 = sadd.s32 1, %s12
    $region7: #{vocoder_forward.1} parent=1 // loop_footer_branch
      %11 = sbr.rel target = $region3
    $region8: #{vocoder_forward.1} parent=1 // loop_exit
      _
    %1574 = vsyncpa [#allocation3], 1
    %s1575 = scalar_lea.sflag [#allocation3], 1
    %1576 = vsyncpa %s1575, 1

</llo_original>
